<compile_context>
chip_gen: v5e
topology: v5e:2x2
jax: 0.10.0
libtpu: 0.0.40
codegen_flags: <defaults>
</compile_context>

<pallas_src>
import jax
import jax.numpy as jnp
from jax.experimental import pallas as pl
from jax.experimental.pallas import tpu as pltpu

THETA0 = 3               # BoundaryLoss(theta0=3, ...)
THETA = 5                # BoundaryLoss(..., theta=5)
PAD = (THETA - 1) // 2   # widest halo needed (2); the k=3 pool reads inside it

NEG_INF = -jnp.inf


def _init_border(pad_ref, H, W):
    """Write the -inf halo ring once; interior writes never touch it."""
    C = pad_ref.shape[0]
    Wp = W + 2 * PAD
    Hp = H + 2 * PAD
    pad_ref[:, 0:PAD, :] = jnp.full((C, PAD, Wp), NEG_INF, jnp.float32)
    pad_ref[:, PAD + H:PAD + H + PAD, :] = jnp.full((C, PAD, Wp), NEG_INF, jnp.float32)
    pad_ref[:, :, 0:PAD] = jnp.full((C, Hp, PAD), NEG_INF, jnp.float32)
    pad_ref[:, :, PAD + W:PAD + W + PAD] = jnp.full((C, Hp, PAD), NEG_INF, jnp.float32)


def _pool_same(x, k, pad_ref, H, W):
    """Stride-1 'same' max pool, kernel k, implicit -inf padding (F.max_pool2d),
    computed separably: k-wide max along W, then k-wide max along H."""
    p = (k - 1) // 2
    # --- max along W (lane axis) ---
    pad_ref[:, PAD:PAD + H, PAD:PAD + W] = x
    row = pad_ref[:, PAD:PAD + H, PAD - p:PAD - p + W]
    for dj in range(-p + 1, p + 1):
        row = jnp.maximum(row, pad_ref[:, PAD:PAD + H, PAD + dj:PAD + dj + W])
    # --- max along H (sublane axis) of the row-max field ---
    pad_ref[:, PAD:PAD + H, PAD:PAD + W] = row
    out = pad_ref[:, PAD - p:PAD - p + H, PAD:PAD + W]
    for di in range(-p + 1, p + 1):
        out = jnp.maximum(out, pad_ref[:, PAD + di:PAD + di + H, PAD:PAD + W])
    return out


def _spatial_sum(x):
    """(C, H, W) -> (C, 1) sum over the spatial dims."""
    return jnp.sum(jnp.sum(x, axis=2), axis=1, keepdims=True)


def _boundary_kernel(pred_ref, gt_ref, out_ref, pad_ref):
    _, C, H, W = pred_ref.shape

    # Halo ring init (once per grid step; safe with per-core scratch).
    _init_border(pad_ref, H, W)

    # ---------- ground-truth path first (fewer live full-size slabs) ----------
    gt = gt_ref[0]                                                 # (H, W) int32
    cls = jax.lax.broadcasted_iota(jnp.int32, (C, H, W), 0)
    inv_gt = (cls != gt[None, :, :]).astype(jnp.float32)           # == 1 - one_hot

    gt_b = _pool_same(inv_gt, THETA0, pad_ref, H, W) - inv_gt
    gt_b_ext = _pool_same(gt_b, THETA, pad_ref, H, W)
    sum_gb = _spatial_sum(gt_b)

    # ---------- prediction path ----------
    pred = pred_ref[0]                                             # (C, H, W) f32
    m = jnp.max(pred, axis=0, keepdims=True)
    e = jnp.exp(pred - m)
    denom = jnp.sum(e, axis=0, keepdims=True)
    sm = e * pl.reciprocal(denom, approx=False)   # 1 reciprocal + C muls per pixel
    inv_pred = 1.0 - sm

    pred_b = _pool_same(inv_pred, THETA0, pad_ref, H, W) - inv_pred
    num_p = _spatial_sum(pred_b * gt_b_ext)       # gt_b_ext dead after this
    sum_pb = _spatial_sum(pred_b)

    pred_b_ext = _pool_same(pred_b, THETA, pad_ref, H, W)
    num_r = _spatial_sum(pred_b_ext * gt_b)

    P = num_p / (sum_pb + 1e-7)
    R = num_r / (sum_gb + 1e-7)
    bf1 = 2.0 * P * R / (P + R + 1e-7)

    out_ref[...] = (1.0 - bf1).reshape(1, C, 1)


def boundary_loss(pred, gt):
    """pred: (N, C, H, W) float logits, gt: (N, H, W) int labels -> scalar loss."""
    N, C, H, W = pred.shape
    per_nc = pl.pallas_call(
        _boundary_kernel,
        out_shape=jax.ShapeDtypeStruct((N, C, 1), jnp.float32),
        grid_spec=pltpu.PrefetchScalarGridSpec(
            num_scalar_prefetch=0,
            grid=(N,),
            in_specs=[
                pl.BlockSpec((1, C, H, W), lambda n: (n, 0, 0, 0)),
                pl.BlockSpec((1, H, W), lambda n: (n, 0, 0)),
            ],
            out_specs=pl.BlockSpec((1, C, 1), lambda n: (n, 0, 0)),
            scratch_shapes=[
                pltpu.VMEM((C, H + 2 * PAD, W + 2 * PAD), jnp.float32),
            ],
        ),
        compiler_params=pltpu.CompilerParams(
            dimension_semantics=("parallel",),           # batch samples independent
            vmem_limit_bytes=32 * 1024 * 1024,           # re-derive per chip for big H,W
        ),
    )(pred.astype(jnp.float32), gt.astype(jnp.int32))
    # torch.mean(1 - BF1) over the (N, C) matrix
    return jnp.mean(per_nc)


# ----------------------------- pure-JAX reference -----------------------------
def boundary_loss_ref(pred, gt, theta0=THETA0, theta=THETA):
    n, c, _, _ = pred.shape
    sm = jax.nn.softmax(pred, axis=1)
    oh = jax.nn.one_hot(gt, c, axis=1, dtype=pred.dtype)  # (N, C, H, W)

    def mp(x, k):
        p = (k - 1) // 2
        return jax.lax.reduce_window(
            x, -jnp.inf, jax.lax.max,
            window_dimensions=(1, 1, k, k),
            window_strides=(1, 1, 1, 1),
            padding=[(0, 0), (0, 0), (p, p), (p, p)],
        )

    gt_b = mp(1.0 - oh, theta0) - (1.0 - oh)
    pred_b = mp(1.0 - sm, theta0) - (1.0 - sm)
    gt_b_ext = mp(gt_b, theta)
    pred_b_ext = mp(pred_b, theta)

    def s(x):
        return jnp.sum(x.reshape(n, c, -1), axis=2)

    P = s(pred_b * gt_b_ext) / (s(pred_b) + 1e-7)
    R = s(pred_b_ext * gt_b) / (s(gt_b) + 1e-7)
    BF1 = 2.0 * P * R / (P + R + 1e-7)
    return jnp.mean(1.0 - BF1)


if __name__ == "__main__":
    N, C, H, W = 2, 4, 16, 16
    key = jax.random.PRNGKey(0)
    k_pred, k_gt = jax.random.split(key)
    pred = jax.random.normal(k_pred, (N, C, H, W), dtype=jnp.float32)
    gt = jax.random.randint(k_gt, (N, H, W), 0, C, dtype=jnp.int32)

    loss = boundary_loss(pred, gt)
    jax.block_until_ready(loss)

    loss_ref = boundary_loss_ref(pred, gt)
    jax.block_until_ready(loss_ref)

    assert jnp.abs(loss - loss_ref) < 1e-5, (loss, loss_ref)
    print("KERNEL_OK")
</pallas_src>

<mosaic_0001>
module attributes {stable_mosaic.version = 11 : i64} {
  func.func @_boundary_kernel(%arg0: i32, %arg1: memref<1x4x16x16xf32, #tpu.memory_space<vmem>>, %arg2: memref<1x16x16xi32, #tpu.memory_space<vmem>>, %arg3: memref<1x4x1xf32, #tpu.memory_space<vmem>>, %arg4: memref<4x20x20xf32, #tpu.memory_space<vmem>>) attributes {dimension_semantics = [#tpu.dimension_semantics<parallel>], iteration_bounds = array<i64: 2>, scalar_prefetch = 0 : i64, scratch_operands = 1 : i64, tpu.core_type = #tpu.core_type<tc>, window_params = [{transform_indices = @transform_0, window_bounds = array<i64: 1, 4, 16, 16>}, {transform_indices = @transform_1, window_bounds = array<i64: 1, 16, 16>}, {transform_indices = @transform_2, window_bounds = array<i64: 1, 4, 1>}]} {
    %cst = arith.constant 0xFF800000 : f32
    %0 = vector.broadcast %cst : f32 to vector<4x2x20xf32>
    %c0 = arith.constant 0 : index
    %c0_0 = arith.constant 0 : index
    %c0_1 = arith.constant 0 : index
    %1 = vector.load %arg4[%c0, %c0_0, %c0_1] : memref<4x20x20xf32, #tpu.memory_space<vmem>>, vector<4x2x20xf32>
    tpu.vector_store %arg4[%c0, %c0_0, %c0_1], %0 {strides = array<i32>} : memref<4x20x20xf32, #tpu.memory_space<vmem>>, vector<4x2x20xf32>,
    %cst_2 = arith.constant 0xFF800000 : f32
    %2 = vector.broadcast %cst_2 : f32 to vector<4x2x20xf32>
    %c0_3 = arith.constant 0 : index
    %c18 = arith.constant 18 : index
    %c0_4 = arith.constant 0 : index
    %3 = vector.load %arg4[%c0_3, %c18, %c0_4] : memref<4x20x20xf32, #tpu.memory_space<vmem>>, vector<4x2x20xf32>
    tpu.vector_store %arg4[%c0_3, %c18, %c0_4], %2 {strides = array<i32>} : memref<4x20x20xf32, #tpu.memory_space<vmem>>, vector<4x2x20xf32>,
    %cst_5 = arith.constant 0xFF800000 : f32
    %4 = vector.broadcast %cst_5 : f32 to vector<4x20x2xf32>
    %c0_6 = arith.constant 0 : index
    %c0_7 = arith.constant 0 : index
    %c0_8 = arith.constant 0 : index
    %5 = vector.load %arg4[%c0_6, %c0_7, %c0_8] : memref<4x20x20xf32, #tpu.memory_space<vmem>>, vector<4x20x2xf32>
    tpu.vector_store %arg4[%c0_6, %c0_7, %c0_8], %4 {strides = array<i32>} : memref<4x20x20xf32, #tpu.memory_space<vmem>>, vector<4x20x2xf32>,
    %cst_9 = arith.constant 0xFF800000 : f32
    %6 = vector.broadcast %cst_9 : f32 to vector<4x20x2xf32>
    %c0_10 = arith.constant 0 : index
    %c0_11 = arith.constant 0 : index
    %c18_12 = arith.constant 18 : index
    %7 = vector.load %arg4[%c0_10, %c0_11, %c18_12] : memref<4x20x20xf32, #tpu.memory_space<vmem>>, vector<4x20x2xf32>
    tpu.vector_store %arg4[%c0_10, %c0_11, %c18_12], %6 {strides = array<i32>} : memref<4x20x20xf32, #tpu.memory_space<vmem>>, vector<4x20x2xf32>,
    %c0_13 = arith.constant 0 : index
    %c0_14 = arith.constant 0 : index
    %c0_15 = arith.constant 0 : index
    %8 = vector.load %arg2[%c0_13, %c0_14, %c0_15] : memref<1x16x16xi32, #tpu.memory_space<vmem>>, vector<1x16x16xi32>
    %9 = vector.shape_cast %8 : vector<1x16x16xi32> to vector<16x16xi32>
    %10 = tpu.iota {dimensions = array<i32: 0>} : vector<4x16x16xi32>
    %11 = vector.shape_cast %9 : vector<16x16xi32> to vector<1x16x16xi32>
    %12 = vector.broadcast %11 : vector<1x16x16xi32> to vector<4x16x16xi32>
    %13 = arith.cmpi ne, %10, %12 : vector<4x16x16xi32>
    %14 = arith.extui %13 : vector<4x16x16xi1> to vector<4x16x16xi32>
    %15 = arith.sitofp %14 : vector<4x16x16xi32> to vector<4x16x16xf32>
    %c0_16 = arith.constant 0 : index
    %c2 = arith.constant 2 : index
    %c2_17 = arith.constant 2 : index
    %16 = vector.load %arg4[%c0_16, %c2, %c2_17] : memref<4x20x20xf32, #tpu.memory_space<vmem>>, vector<4x16x16xf32>
    tpu.vector_store %arg4[%c0_16, %c2, %c2_17], %15 {strides = array<i32>} : memref<4x20x20xf32, #tpu.memory_space<vmem>>, vector<4x16x16xf32>,
    %c0_18 = arith.constant 0 : index
    %c2_19 = arith.constant 2 : index
    %c1 = arith.constant 1 : index
    %17 = vector.load %arg4[%c0_18, %c2_19, %c1] : memref<4x20x20xf32, #tpu.memory_space<vmem>>, vector<4x16x16xf32>
    %c0_20 = arith.constant 0 : index
    %c2_21 = arith.constant 2 : index
    %c2_22 = arith.constant 2 : index
    %18 = vector.load %arg4[%c0_20, %c2_21, %c2_22] : memref<4x20x20xf32, #tpu.memory_space<vmem>>, vector<4x16x16xf32>
    %19 = arith.maximumf %17, %18 : vector<4x16x16xf32>
    %c0_23 = arith.constant 0 : index
    %c2_24 = arith.constant 2 : index
    %c3 = arith.constant 3 : index
    %20 = vector.load %arg4[%c0_23, %c2_24, %c3] : memref<4x20x20xf32, #tpu.memory_space<vmem>>, vector<4x16x16xf32>
    %21 = arith.maximumf %19, %20 : vector<4x16x16xf32>
    %c0_25 = arith.constant 0 : index
    %c2_26 = arith.constant 2 : index
    %c2_27 = arith.constant 2 : index
    %22 = vector.load %arg4[%c0_25, %c2_26, %c2_27] : memref<4x20x20xf32, #tpu.memory_space<vmem>>, vector<4x16x16xf32>
    tpu.vector_store %arg4[%c0_25, %c2_26, %c2_27], %21 {strides = array<i32>} : memref<4x20x20xf32, #tpu.memory_space<vmem>>, vector<4x16x16xf32>,
    %c0_28 = arith.constant 0 : index
    %c1_29 = arith.constant 1 : index
    %c2_30 = arith.constant 2 : index
    %23 = vector.load %arg4[%c0_28, %c1_29, %c2_30] : memref<4x20x20xf32, #tpu.memory_space<vmem>>, vector<4x16x16xf32>
    %c0_31 = arith.constant 0 : index
    %c2_32 = arith.constant 2 : index
    %c2_33 = arith.constant 2 : index
    %24 = vector.load %arg4[%c0_31, %c2_32, %c2_33] : memref<4x20x20xf32, #tpu.memory_space<vmem>>, vector<4x16x16xf32>
    %25 = arith.maximumf %23, %24 : vector<4x16x16xf32>
    %c0_34 = arith.constant 0 : index
    %c3_35 = arith.constant 3 : index
    %c2_36 = arith.constant 2 : index
    %26 = vector.load %arg4[%c0_34, %c3_35, %c2_36] : memref<4x20x20xf32, #tpu.memory_space<vmem>>, vector<4x16x16xf32>
    %27 = arith.maximumf %25, %26 : vector<4x16x16xf32>
    %28 = arith.subf %27, %15 : vector<4x16x16xf32>
    %c0_37 = arith.constant 0 : index
    %c2_38 = arith.constant 2 : index
    %c2_39 = arith.constant 2 : index
    %29 = vector.load %arg4[%c0_37, %c2_38, %c2_39] : memref<4x20x20xf32, #tpu.memory_space<vmem>>, vector<4x16x16xf32>
    tpu.vector_store %arg4[%c0_37, %c2_38, %c2_39], %28 {strides = array<i32>} : memref<4x20x20xf32, #tpu.memory_space<vmem>>, vector<4x16x16xf32>,
    %c0_40 = arith.constant 0 : index
    %c2_41 = arith.constant 2 : index
    %c0_42 = arith.constant 0 : index
    %30 = vector.load %arg4[%c0_40, %c2_41, %c0_42] : memref<4x20x20xf32, #tpu.memory_space<vmem>>, vector<4x16x16xf32>
    %c0_43 = arith.constant 0 : index
    %c2_44 = arith.constant 2 : index
    %c1_45 = arith.constant 1 : index
    %31 = vector.load %arg4[%c0_43, %c2_44, %c1_45] : memref<4x20x20xf32, #tpu.memory_space<vmem>>, vector<4x16x16xf32>
    %32 = arith.maximumf %30, %31 : vector<4x16x16xf32>
    %c0_46 = arith.constant 0 : index
    %c2_47 = arith.constant 2 : index
    %c2_48 = arith.constant 2 : index
    %33 = vector.load %arg4[%c0_46, %c2_47, %c2_48] : memref<4x20x20xf32, #tpu.memory_space<vmem>>, vector<4x16x16xf32>
    %34 = arith.maximumf %32, %33 : vector<4x16x16xf32>
    %c0_49 = arith.constant 0 : index
    %c2_50 = arith.constant 2 : index
    %c3_51 = arith.constant 3 : index
    %35 = vector.load %arg4[%c0_49, %c2_50, %c3_51] : memref<4x20x20xf32, #tpu.memory_space<vmem>>, vector<4x16x16xf32>
    %36 = arith.maximumf %34, %35 : vector<4x16x16xf32>
    %c0_52 = arith.constant 0 : index
    %c2_53 = arith.constant 2 : index
    %c4 = arith.constant 4 : index
    %37 = vector.load %arg4[%c0_52, %c2_53, %c4] : memref<4x20x20xf32, #tpu.memory_space<vmem>>, vector<4x16x16xf32>
    %38 = arith.maximumf %36, %37 : vector<4x16x16xf32>
    %c0_54 = arith.constant 0 : index
    %c2_55 = arith.constant 2 : index
    %c2_56 = arith.constant 2 : index
    %39 = vector.load %arg4[%c0_54, %c2_55, %c2_56] : memref<4x20x20xf32, #tpu.memory_space<vmem>>, vector<4x16x16xf32>
    tpu.vector_store %arg4[%c0_54, %c2_55, %c2_56], %38 {strides = array<i32>} : memref<4x20x20xf32, #tpu.memory_space<vmem>>, vector<4x16x16xf32>,
    %c0_57 = arith.constant 0 : index
    %c0_58 = arith.constant 0 : index
    %c2_59 = arith.constant 2 : index
    %40 = vector.load %arg4[%c0_57, %c0_58, %c2_59] : memref<4x20x20xf32, #tpu.memory_space<vmem>>, vector<4x16x16xf32>
    %c0_60 = arith.constant 0 : index
    %c1_61 = arith.constant 1 : index
    %c2_62 = arith.constant 2 : index
    %41 = vector.load %arg4[%c0_60, %c1_61, %c2_62] : memref<4x20x20xf32, #tpu.memory_space<vmem>>, vector<4x16x16xf32>
    %42 = arith.maximumf %40, %41 : vector<4x16x16xf32>
    %c0_63 = arith.constant 0 : index
    %c2_64 = arith.constant 2 : index
    %c2_65 = arith.constant 2 : index
    %43 = vector.load %arg4[%c0_63, %c2_64, %c2_65] : memref<4x20x20xf32, #tpu.memory_space<vmem>>, vector<4x16x16xf32>
    %44 = arith.maximumf %42, %43 : vector<4x16x16xf32>
    %c0_66 = arith.constant 0 : index
    %c3_67 = arith.constant 3 : index
    %c2_68 = arith.constant 2 : index
    %45 = vector.load %arg4[%c0_66, %c3_67, %c2_68] : memref<4x20x20xf32, #tpu.memory_space<vmem>>, vector<4x16x16xf32>
    %46 = arith.maximumf %44, %45 : vector<4x16x16xf32>
    %c0_69 = arith.constant 0 : index
    %c4_70 = arith.constant 4 : index
    %c2_71 = arith.constant 2 : index
    %47 = vector.load %arg4[%c0_69, %c4_70, %c2_71] : memref<4x20x20xf32, #tpu.memory_space<vmem>>, vector<4x16x16xf32>
    %48 = arith.maximumf %46, %47 : vector<4x16x16xf32>
    %cst_72 = arith.constant dense<0.000000e+00> : vector<4x16xf32>
    %49 = vector.multi_reduction <add>, %28, %cst_72 [2] : vector<4x16x16xf32> to vector<4x16xf32>
    %cst_73 = arith.constant dense<0.000000e+00> : vector<4xf32>
    %50 = vector.multi_reduction <add>, %49, %cst_73 [1] : vector<4x16xf32> to vector<4xf32>
    %51 = vector.shape_cast %50 : vector<4xf32> to vector<4x1xf32>
    %c0_74 = arith.constant 0 : index
    %c0_75 = arith.constant 0 : index
    %c0_76 = arith.constant 0 : index
    %c0_77 = arith.constant 0 : index
    %52 = vector.load %arg1[%c0_74, %c0_75, %c0_76, %c0_77] : memref<1x4x16x16xf32, #tpu.memory_space<vmem>>, vector<1x4x16x16xf32>
    %53 = vector.shape_cast %52 : vector<1x4x16x16xf32> to vector<4x16x16xf32>
    %cst_78 = arith.constant dense<0xFF800000> : vector<16x16xf32>
    %54 = vector.multi_reduction <maximumf>, %53, %cst_78 [0] : vector<4x16x16xf32> to vector<16x16xf32>
    %55 = vector.shape_cast %54 : vector<16x16xf32> to vector<1x16x16xf32>
    %56 = vector.broadcast %55 : vector<1x16x16xf32> to vector<4x16x16xf32>
    %57 = arith.subf %53, %56 : vector<4x16x16xf32>
    %58 = math.exp %57 : vector<4x16x16xf32>
    %cst_79 = arith.constant dense<0.000000e+00> : vector<16x16xf32>
    %59 = vector.multi_reduction <add>, %58, %cst_79 [0] : vector<4x16x16xf32> to vector<16x16xf32>
    %60 = vector.shape_cast %59 : vector<16x16xf32> to vector<1x16x16xf32>
    %61 = tpu.reciprocal %60 : vector<1x16x16xf32> -> vector<1x16x16xf32>
    %62 = vector.broadcast %61 : vector<1x16x16xf32> to vector<4x16x16xf32>
    %63 = arith.mulf %58, %62 : vector<4x16x16xf32>
    %cst_80 = arith.constant 1.000000e+00 : f32
    %64 = vector.broadcast %cst_80 : f32 to vector<4x16x16xf32>
    %65 = arith.subf %64, %63 : vector<4x16x16xf32>
    %c0_81 = arith.constant 0 : index
    %c2_82 = arith.constant 2 : index
    %c2_83 = arith.constant 2 : index
    %66 = vector.load %arg4[%c0_81, %c2_82, %c2_83] : memref<4x20x20xf32, #tpu.memory_space<vmem>>, vector<4x16x16xf32>
    tpu.vector_store %arg4[%c0_81, %c2_82, %c2_83], %65 {strides = array<i32>} : memref<4x20x20xf32, #tpu.memory_space<vmem>>, vector<4x16x16xf32>,
    %c0_84 = arith.constant 0 : index
    %c2_85 = arith.constant 2 : index
    %c1_86 = arith.constant 1 : index
    %67 = vector.load %arg4[%c0_84, %c2_85, %c1_86] : memref<4x20x20xf32, #tpu.memory_space<vmem>>, vector<4x16x16xf32>
    %c0_87 = arith.constant 0 : index
    %c2_88 = arith.constant 2 : index
    %c2_89 = arith.constant 2 : index
    %68 = vector.load %arg4[%c0_87, %c2_88, %c2_89] : memref<4x20x20xf32, #tpu.memory_space<vmem>>, vector<4x16x16xf32>
    %69 = arith.maximumf %67, %68 : vector<4x16x16xf32>
    %c0_90 = arith.constant 0 : index
    %c2_91 = arith.constant 2 : index
    %c3_92 = arith.constant 3 : index
    %70 = vector.load %arg4[%c0_90, %c2_91, %c3_92] : memref<4x20x20xf32, #tpu.memory_space<vmem>>, vector<4x16x16xf32>
    %71 = arith.maximumf %69, %70 : vector<4x16x16xf32>
    %c0_93 = arith.constant 0 : index
    %c2_94 = arith.constant 2 : index
    %c2_95 = arith.constant 2 : index
    %72 = vector.load %arg4[%c0_93, %c2_94, %c2_95] : memref<4x20x20xf32, #tpu.memory_space<vmem>>, vector<4x16x16xf32>
    tpu.vector_store %arg4[%c0_93, %c2_94, %c2_95], %71 {strides = array<i32>} : memref<4x20x20xf32, #tpu.memory_space<vmem>>, vector<4x16x16xf32>,
    %c0_96 = arith.constant 0 : index
    %c1_97 = arith.constant 1 : index
    %c2_98 = arith.constant 2 : index
    %73 = vector.load %arg4[%c0_96, %c1_97, %c2_98] : memref<4x20x20xf32, #tpu.memory_space<vmem>>, vector<4x16x16xf32>
    %c0_99 = arith.constant 0 : index
    %c2_100 = arith.constant 2 : index
    %c2_101 = arith.constant 2 : index
    %74 = vector.load %arg4[%c0_99, %c2_100, %c2_101] : memref<4x20x20xf32, #tpu.memory_space<vmem>>, vector<4x16x16xf32>
    %75 = arith.maximumf %73, %74 : vector<4x16x16xf32>
    %c0_102 = arith.constant 0 : index
    %c3_103 = arith.constant 3 : index
    %c2_104 = arith.constant 2 : index
    %76 = vector.load %arg4[%c0_102, %c3_103, %c2_104] : memref<4x20x20xf32, #tpu.memory_space<vmem>>, vector<4x16x16xf32>
    %77 = arith.maximumf %75, %76 : vector<4x16x16xf32>
    %78 = arith.subf %77, %65 : vector<4x16x16xf32>
    %79 = arith.mulf %78, %48 : vector<4x16x16xf32>
    %cst_105 = arith.constant dense<0.000000e+00> : vector<4x16xf32>
    %80 = vector.multi_reduction <add>, %79, %cst_105 [2] : vector<4x16x16xf32> to vector<4x16xf32>
    %cst_106 = arith.constant dense<0.000000e+00> : vector<4xf32>
    %81 = vector.multi_reduction <add>, %80, %cst_106 [1] : vector<4x16xf32> to vector<4xf32>
    %82 = vector.shape_cast %81 : vector<4xf32> to vector<4x1xf32>
    %cst_107 = arith.constant dense<0.000000e+00> : vector<4x16xf32>
    %83 = vector.multi_reduction <add>, %78, %cst_107 [2] : vector<4x16x16xf32> to vector<4x16xf32>
    %cst_108 = arith.constant dense<0.000000e+00> : vector<4xf32>
    %84 = vector.multi_reduction <add>, %83, %cst_108 [1] : vector<4x16xf32> to vector<4xf32>
    %85 = vector.shape_cast %84 : vector<4xf32> to vector<4x1xf32>
    %c0_109 = arith.constant 0 : index
    %c2_110 = arith.constant 2 : index
    %c2_111 = arith.constant 2 : index
    %86 = vector.load %arg4[%c0_109, %c2_110, %c2_111] : memref<4x20x20xf32, #tpu.memory_space<vmem>>, vector<4x16x16xf32>
    tpu.vector_store %arg4[%c0_109, %c2_110, %c2_111], %78 {strides = array<i32>} : memref<4x20x20xf32, #tpu.memory_space<vmem>>, vector<4x16x16xf32>,
    %c0_112 = arith.constant 0 : index
    %c2_113 = arith.constant 2 : index
    %c0_114 = arith.constant 0 : index
    %87 = vector.load %arg4[%c0_112, %c2_113, %c0_114] : memref<4x20x20xf32, #tpu.memory_space<vmem>>, vector<4x16x16xf32>
    %c0_115 = arith.constant 0 : index
    %c2_116 = arith.constant 2 : index
    %c1_117 = arith.constant 1 : index
    %88 = vector.load %arg4[%c0_115, %c2_116, %c1_117] : memref<4x20x20xf32, #tpu.memory_space<vmem>>, vector<4x16x16xf32>
    %89 = arith.maximumf %87, %88 : vector<4x16x16xf32>
    %c0_118 = arith.constant 0 : index
    %c2_119 = arith.constant 2 : index
    %c2_120 = arith.constant 2 : index
    %90 = vector.load %arg4[%c0_118, %c2_119, %c2_120] : memref<4x20x20xf32, #tpu.memory_space<vmem>>, vector<4x16x16xf32>
    %91 = arith.maximumf %89, %90 : vector<4x16x16xf32>
    %c0_121 = arith.constant 0 : index
    %c2_122 = arith.constant 2 : index
    %c3_123 = arith.constant 3 : index
    %92 = vector.load %arg4[%c0_121, %c2_122, %c3_123] : memref<4x20x20xf32, #tpu.memory_space<vmem>>, vector<4x16x16xf32>
    %93 = arith.maximumf %91, %92 : vector<4x16x16xf32>
    %c0_124 = arith.constant 0 : index
    %c2_125 = arith.constant 2 : index
    %c4_126 = arith.constant 4 : index
    %94 = vector.load %arg4[%c0_124, %c2_125, %c4_126] : memref<4x20x20xf32, #tpu.memory_space<vmem>>, vector<4x16x16xf32>
    %95 = arith.maximumf %93, %94 : vector<4x16x16xf32>
    %c0_127 = arith.constant 0 : index
    %c2_128 = arith.constant 2 : index
    %c2_129 = arith.constant 2 : index
    %96 = vector.load %arg4[%c0_127, %c2_128, %c2_129] : memref<4x20x20xf32, #tpu.memory_space<vmem>>, vector<4x16x16xf32>
    tpu.vector_store %arg4[%c0_127, %c2_128, %c2_129], %95 {strides = array<i32>} : memref<4x20x20xf32, #tpu.memory_space<vmem>>, vector<4x16x16xf32>,
    %c0_130 = arith.constant 0 : index
    %c0_131 = arith.constant 0 : index
    %c2_132 = arith.constant 2 : index
    %97 = vector.load %arg4[%c0_130, %c0_131, %c2_132] : memref<4x20x20xf32, #tpu.memory_space<vmem>>, vector<4x16x16xf32>
    %c0_133 = arith.constant 0 : index
    %c1_134 = arith.constant 1 : index
    %c2_135 = arith.constant 2 : index
    %98 = vector.load %arg4[%c0_133, %c1_134, %c2_135] : memref<4x20x20xf32, #tpu.memory_space<vmem>>, vector<4x16x16xf32>
    %99 = arith.maximumf %97, %98 : vector<4x16x16xf32>
    %c0_136 = arith.constant 0 : index
    %c2_137 = arith.constant 2 : index
    %c2_138 = arith.constant 2 : index
    %100 = vector.load %arg4[%c0_136, %c2_137, %c2_138] : memref<4x20x20xf32, #tpu.memory_space<vmem>>, vector<4x16x16xf32>
    %101 = arith.maximumf %99, %100 : vector<4x16x16xf32>
    %c0_139 = arith.constant 0 : index
    %c3_140 = arith.constant 3 : index
    %c2_141 = arith.constant 2 : index
    %102 = vector.load %arg4[%c0_139, %c3_140, %c2_141] : memref<4x20x20xf32, #tpu.memory_space<vmem>>, vector<4x16x16xf32>
    %103 = arith.maximumf %101, %102 : vector<4x16x16xf32>
    %c0_142 = arith.constant 0 : index
    %c4_143 = arith.constant 4 : index
    %c2_144 = arith.constant 2 : index
    %104 = vector.load %arg4[%c0_142, %c4_143, %c2_144] : memref<4x20x20xf32, #tpu.memory_space<vmem>>, vector<4x16x16xf32>
    %105 = arith.maximumf %103, %104 : vector<4x16x16xf32>
    %106 = arith.mulf %105, %28 : vector<4x16x16xf32>
    %cst_145 = arith.constant dense<0.000000e+00> : vector<4x16xf32>
    %107 = vector.multi_reduction <add>, %106, %cst_145 [2] : vector<4x16x16xf32> to vector<4x16xf32>
    %cst_146 = arith.constant dense<0.000000e+00> : vector<4xf32>
    %108 = vector.multi_reduction <add>, %107, %cst_146 [1] : vector<4x16xf32> to vector<4xf32>
    %109 = vector.shape_cast %108 : vector<4xf32> to vector<4x1xf32>
    %cst_147 = arith.constant 1.000000e-07 : f32
    %110 = vector.broadcast %cst_147 : f32 to vector<4x1xf32>
    %111 = arith.addf %85, %110 : vector<4x1xf32>
    %112 = arith.divf %82, %111 : vector<4x1xf32>
    %cst_148 = arith.constant 1.000000e-07 : f32
    %113 = vector.broadcast %cst_148 : f32 to vector<4x1xf32>
    %114 = arith.addf %51, %113 : vector<4x1xf32>
    %115 = arith.divf %109, %114 : vector<4x1xf32>
    %cst_149 = arith.constant 2.000000e+00 : f32
    %116 = vector.broadcast %cst_149 : f32 to vector<4x1xf32>
    %117 = arith.mulf %116, %112 : vector<4x1xf32>
    %118 = arith.mulf %117, %115 : vector<4x1xf32>
    %119 = arith.addf %112, %115 : vector<4x1xf32>
    %cst_150 = arith.constant 1.000000e-07 : f32
    %120 = vector.broadcast %cst_150 : f32 to vector<4x1xf32>
    %121 = arith.addf %119, %120 : vector<4x1xf32>
    %122 = arith.divf %118, %121 : vector<4x1xf32>
    %cst_151 = arith.constant 1.000000e+00 : f32
    %123 = vector.broadcast %cst_151 : f32 to vector<4x1xf32>
    %124 = arith.subf %123, %122 : vector<4x1xf32>
    %125 = vector.shape_cast %124 : vector<4x1xf32> to vector<1x4x1xf32>
    %c0_152 = arith.constant 0 : index
    %c0_153 = arith.constant 0 : index
    %c0_154 = arith.constant 0 : index
    %126 = vector.load %arg3[%c0_152, %c0_153, %c0_154] : memref<1x4x1xf32, #tpu.memory_space<vmem>>, vector<1x4x1xf32>
    tpu.vector_store %arg3[%c0_152, %c0_153, %c0_154], %125 {strides = array<i32>} : memref<1x4x1xf32, #tpu.memory_space<vmem>>, vector<1x4x1xf32>,
    return
  }
  func.func @transform_0(%arg0: i32) -> (i32, i32, i32, i32) {
    %c0_i32 = arith.constant 0 : i32
    %c0_i32_0 = arith.constant 0 : i32
    %c0_i32_1 = arith.constant 0 : i32
    %c0_i32_2 = arith.constant 0 : i32
    return %arg0, %c0_i32, %c0_i32_0, %c0_i32_1 : i32, i32, i32, i32
  }
  func.func @transform_1(%arg0: i32) -> (i32, i32, i32) {
    %c0_i32 = arith.constant 0 : i32
    %c0_i32_0 = arith.constant 0 : i32
    %c0_i32_1 = arith.constant 0 : i32
    return %arg0, %c0_i32, %c0_i32_0 : i32, i32, i32
  }
  func.func @transform_2(%arg0: i32) -> (i32, i32, i32) {
    %c0_i32 = arith.constant 0 : i32
    %c0_i32_0 = arith.constant 0 : i32
    %c0_i32_1 = arith.constant 0 : i32
    return %arg0, %c0_i32, %c0_i32_0 : i32, i32, i32
  }
}

</mosaic_0001>

<llo_original>
// kernel: tpu_custom_call.1
$region0: #{tpu_custom_call.1}
  #allocation0 [shape = 'u32[]', space=smem, size = 0x4, offset = 0x4, fixed_abs, tag = 'smem constant byte address 0x4 - core index']
  #allocation1 [shape = 'u32[72,128]{1,0:T(1,128)}', space=vmem, size = 0x9000, scoped, tag = 'internal scratch']
  #allocation2 [shape = 'f32[4,20,20]{2,1,0:T(8,128)}', space=vmem, size = 0xc000, scoped, tag = 'scratch operand']
  %s0 = inlined_call_operand.hbm [shape: f32[2,4,16,16], index: 0, kind: input, shape index: {}]
  %s1 = inlined_call_operand.hbm [shape: s32[2,16,16], index: 1, kind: input, shape index: {}]
  %s2 = inlined_call_operand.vmem [shape: f32[2,4,1], index: 2, kind: output, shape index: {}]
  %s3 = sld [smem:[#allocation0]]
  $region49: #{tpu_custom_call.1} parent=0
    _
  %s5 = ssub.s32 1, %s3
  %s6 = scalar_select 0, %s5, %s3
  $region1: #{tpu_custom_call.1} parent=0
    #allocation3 [shape = 'u8[65536]{0}', space=vmem, size = 0x10000, scoped, tag = 'input window, operand 0']
    #allocation4 [shape = 's32[2]{0}', space=sflag, size = 0x8, scoped, tag = 'scoped memory for tpu_custom_call.1']
    #allocation5 [shape = 'u8[16384]{0}', space=vmem, size = 0x4000, scoped, tag = 'input window, operand 1']
    #allocation6 [shape = 's32[2]{0}', space=sflag, size = 0x8, scoped, tag = 'scoped memory for tpu_custom_call.1']
    %7 = vsyncpa [#allocation4], 0
    %s8 = scalar_lea.sflag [#allocation4], 1
    %9 = vsyncpa %s8, 0
    %10 = vsyncpa [#allocation6], 0
    %s11 = scalar_lea.sflag [#allocation6], 1
    %12 = vsyncpa %s11, 0
    loop: start=0, step=1, limit=4
    $region2: #{tpu_custom_call.1} parent=1 // loop_pre_header
      _
    $region3: #{tpu_custom_call.1} parent=1 // loop_header
      %s14 = sphi 0, %s18
      %p15 = scmp.ge.s32.totalorder %s14, 4
      %s24 = sphi 0, %s26
      %s27 = sphi 0, %s24
      %s28 = sphi 0, %s27
      %s44 = sphi 0, %s28
      %s50 = sphi 0, %s52
      %s53 = sphi 0, %s50
      %s54 = sphi 0, %s53
      %s70 = sphi 0, %s54
      %s76 = sphi 0, %s78
      %s79 = sphi 0, %s76
      %s80 = sphi 0, %s79
      %s96 = sphi 0, %s80
    $region4: #{tpu_custom_call.1} parent=1 // loop_header_branch
      %17 = sbr.rel (%p15) target = $region8
    $region5: #{tpu_custom_call.1} parent=1 // loop_body
      %s19 = ssub.s32 %s14, 1
      %s20 = ssub.s32 %s14, 2
      %s21 = sadd.s32 %s14, 1
      %s22 = ssub.s32 %s14, %s21
      %p23 = scmp.eq.s32.totalorder %s22, 0
      %s25 = sadd.s32 %s24, 1
      %s26 = scalar_select %p23, %s24, %s25
      %p29 = pneg %p23
      %p30 = scmp.eq.s32.totalorder %s14, 1
      %p31 = por %p29, %p30
      %p32 = scmp.ne.s32.totalorder %s24, %s27
      %p33 = scmp.eq.s32.totalorder %s14, 0
      %p34 = por %p32, %p33
      %p35 = scmp.ne.s32.totalorder %s24, %s27
      %p36 = scmp.eq.s32.totalorder %s19, 1
      %p37 = por %p35, %p36
      %p38 = scmp.ne.s32.totalorder %s27, %s28
      %p39 = scmp.eq.s32.totalorder %s19, 0
      %p40 = por %p38, %p39
      %p41 = scmp.ne.s32.totalorder %s27, %s28
      %p42 = scmp.eq.s32.totalorder %s20, 1
      %p43 = por %p41, %p42
      %p45 = scmp.ne.s32.totalorder %s28, %s44
      %p46 = scmp.eq.s32.totalorder %s20, 0
      %p47 = por %p45, %p46
      %s48 = ssub.s32 %s14, %s21
      %p49 = scmp.eq.s32.totalorder %s48, 0
      %s51 = sadd.s32 %s50, 1
      %s52 = scalar_select %p49, %s50, %s51
      %p55 = pneg %p49
      %p56 = scmp.eq.s32.totalorder %s14, 1
      %p57 = por %p55, %p56
      %p58 = scmp.ne.s32.totalorder %s50, %s53
      %p59 = scmp.eq.s32.totalorder %s14, 0
      %p60 = por %p58, %p59
      %p61 = scmp.ne.s32.totalorder %s50, %s53
      %p62 = scmp.eq.s32.totalorder %s19, 1
      %p63 = por %p61, %p62
      %p64 = scmp.ne.s32.totalorder %s53, %s54
      %p65 = scmp.eq.s32.totalorder %s19, 0
      %p66 = por %p64, %p65
      %p67 = scmp.ne.s32.totalorder %s53, %s54
      %p68 = scmp.eq.s32.totalorder %s20, 1
      %p69 = por %p67, %p68
      %p71 = scmp.ne.s32.totalorder %s54, %s70
      %p72 = scmp.eq.s32.totalorder %s20, 0
      %p73 = por %p71, %p72
      %s74 = ssub.s32 %s14, %s21
      %p75 = scmp.eq.s32.totalorder %s74, 0
      %s77 = sadd.s32 %s76, 1
      %s78 = scalar_select %p75, %s76, %s77
      %p81 = pneg %p75
      %p82 = scmp.eq.s32.totalorder %s14, 1
      %p83 = por %p81, %p82
      %p84 = scmp.ne.s32.totalorder %s76, %s79
      %p85 = scmp.eq.s32.totalorder %s14, 0
      %p86 = por %p84, %p85
      %p87 = scmp.ne.s32.totalorder %s76, %s79
      %p88 = scmp.eq.s32.totalorder %s19, 1
      %p89 = por %p87, %p88
      %p90 = scmp.ne.s32.totalorder %s79, %s80
      %p91 = scmp.eq.s32.totalorder %s19, 0
      %p92 = por %p90, %p91
      %p93 = scmp.ne.s32.totalorder %s79, %s80
      %p94 = scmp.eq.s32.totalorder %s20, 1
      %p95 = por %p93, %p94
      %p97 = scmp.ne.s32.totalorder %s80, %s96
      %p98 = scmp.eq.s32.totalorder %s20, 0
      %p99 = por %p97, %p98
      %p100 = scmp.le.s32.totalorder 1, %s14
      %p101 = scmp.lt.s32.totalorder %s14, 3
      %p102 = pnand %p100, %p101
      %p103 = pneg %p102
      // Predicated region
      $region9: #{tpu_custom_call.1} parent=5 // pred_check
        _
      $region10: #{tpu_custom_call.1} parent=5 // pred_check_branch
        %105 = sbr.rel (%p102) target = $region12
      $region11: #{tpu_custom_call.1} parent=5 // pred_region
        %s106 = ssub.s32 %s14, 1
      $region12: #{tpu_custom_call.1} parent=5 // pred_fallthru
        _
      %p107 = scmp.lt.s32.totalorder %s14, 2
      // Predicated region
      $region13: #{tpu_custom_call.1} parent=5 // pred_check
        %p108 = pneg %p107
      $region14: #{tpu_custom_call.1} parent=5 // pred_check_branch
        %110 = sbr.rel (%p108) target = $region16
      $region15: #{tpu_custom_call.1} parent=5 // pred_region
        // Predicated region
        $region17: #{tpu_custom_call.1} parent=15 // pred_check
          %p111 = pneg %p34
        $region18: #{tpu_custom_call.1} parent=15 // pred_check_branch
          %113 = sbr.rel (%p111) target = $region20
        $region19: #{tpu_custom_call.1} parent=15 // pred_region
          %s114 = sand.u32 %s24, 1
          %s115 = scalar_lea.sflag [#allocation4], %s114
          %s116 = sand.u32 %s24, 1
          %s117 = smul.addr %s116, 64
          %s118 = scalar_lea.vmem [#allocation3], %s117
          %120 = vsyncadd %s115, 0
          %s121 = smul.addr %s14, 8
          %s122 = smul.addr %s121, 8
          %s123 = scalar_lea.hbm %s0, %s122
          %s124 = sshll.u32 %s123, 4
          %s125 = int_to_ptr.hbm [resolvable:$true] %s124
          %s126 = sshll.u32 %s118, 4
          %s127 = int_to_ptr.vmem [resolvable:$true] %s126
          %132 = dma.hbm_to_vmem [thread:$0]  %s125, 1024, %s127, %s115, 128, 128, 8
        $region20: #{tpu_custom_call.1} parent=15 // pred_fallthru
          _
        // Predicated region
        $region21: #{tpu_custom_call.1} parent=15 // pred_check
          %p133 = pneg %p60
        $region22: #{tpu_custom_call.1} parent=15 // pred_check_branch
          %135 = sbr.rel (%p133) target = $region24
        $region23: #{tpu_custom_call.1} parent=15 // pred_region
          %s136 = sand.u32 %s50, 1
          %s137 = scalar_lea.sflag [#allocation6], %s136
          %s138 = sand.u32 %s50, 1
          %s139 = smul.addr %s138, 16
          %s140 = scalar_lea.vmem [#allocation5], %s139
          %142 = vsyncadd %s137, 0
          %s143 = smul.addr %s14, 2
          %s144 = smul.addr %s143, 8
          %s145 = scalar_lea.hbm %s1, %s144
          %s146 = sshll.u32 %s145, 4
          %s147 = int_to_ptr.hbm [resolvable:$true] %s146
          %s148 = sshll.u32 %s140, 4
          %s149 = int_to_ptr.vmem [resolvable:$true] %s148
          %154 = dma.hbm_to_vmem [thread:$0]  %s147, 256, %s149, %s137, 128, 128, 8
        $region24: #{tpu_custom_call.1} parent=15 // pred_fallthru
          _
      $region16: #{tpu_custom_call.1} parent=5 // pred_fallthru
        _
      %p155 = scmp.le.s32.totalorder 1, %s14
      %p156 = scmp.lt.s32.totalorder %s14, 3
      %p157 = pnand %p155, %p156
      %p158 = pneg %p157
      // Predicated region
      $region25: #{tpu_custom_call.1} parent=5 // pred_check
        _
      $region26: #{tpu_custom_call.1} parent=5 // pred_check_branch
        %160 = sbr.rel (%p157) target = $region28
      $region27: #{tpu_custom_call.1} parent=5 // pred_region
        %s161 = ssub.s32 %s14, 1
        %s162 = sand.u32 %s27, 1
        %s163 = scalar_lea.sflag [#allocation4], %s162
        %s164 = sand.u32 %s27, 1
        %s165 = smul.addr %s164, 64
        %s166 = scalar_lea.vmem [#allocation3], %s165
        // Predicated region
        $region29: #{tpu_custom_call.1} parent=27 // pred_check
          %p167 = pneg %p40
        $region30: #{tpu_custom_call.1} parent=27 // pred_check_branch
          %169 = sbr.rel (%p167) target = $region32
        $region31: #{tpu_custom_call.1} parent=27 // pred_region
          %171 = dma.done %s163, 1024
        $region32: #{tpu_custom_call.1} parent=27 // pred_fallthru
          _
        %s172 = sand.u32 %s53, 1
        %s173 = scalar_lea.sflag [#allocation6], %s172
        %s174 = sand.u32 %s53, 1
        %s175 = smul.addr %s174, 16
        %s176 = scalar_lea.vmem [#allocation5], %s175
        // Predicated region
        $region33: #{tpu_custom_call.1} parent=27 // pred_check
          %p177 = pneg %p66
        $region34: #{tpu_custom_call.1} parent=27 // pred_check_branch
          %179 = sbr.rel (%p177) target = $region36
        $region35: #{tpu_custom_call.1} parent=27 // pred_region
          %181 = dma.done %s173, 256
        $region36: #{tpu_custom_call.1} parent=27 // pred_fallthru
          _
        %s182 = sand.u32 %s27, 1
        %s183 = scalar_lea.sflag [#allocation4], %s182
        %s184 = sand.u32 %s27, 1
        %s185 = smul.addr %s184, 64
        %s186 = scalar_lea.vmem [#allocation3], %s185
        %p187 = pneg %p40
        %p188 = pneg %p37
        %s189 = sand.u32 %s53, 1
        %s190 = scalar_lea.sflag [#allocation6], %s189
        %s191 = sand.u32 %s53, 1
        %s192 = smul.addr %s191, 16
        %s193 = scalar_lea.vmem [#allocation5], %s192
        %p194 = pneg %p66
        %p195 = pneg %p63
        %p196 = pneg %p92
        %p197 = pneg %p89
        %p198 = scmp.lt.s32.totalorder %s19, 1
        %s199 = scalar_select %p198, %s19, 1
        %s200 = smul.addr %s199, 4
        %s201 = scalar_lea.vmem %s2, %s200
        %p202 = scmp.lt.s32.totalorder %s19, 1
        %s203 = scalar_select %p202, %s19, 1
        %s204 = smul.addr %s203, 4
        %s205 = scalar_lea.vmem %s2, %s204
        %vm206 = vcmask 156672
        %207 = vst.msk [vmem:[#allocation2] sm:$0x3] %vm206, -inf
        %208 = vst.msk [vmem:[#allocation2 + $0x18] sm:$0x3] %vm206, -inf
        %209 = vst.msk [vmem:[#allocation2 + $0x30] sm:$0x3] %vm206, -inf
        %210 = vst.msk [vmem:[#allocation2 + $0x48] sm:$0x3] %vm206, -inf
        %211 = vst.msk [vmem:[#allocation2 + $0x12] sm:$0x3] %vm206, -inf
        %212 = vst.msk [vmem:[#allocation2 + $0x2a] sm:$0x3] %vm206, -inf
        %213 = vst.msk [vmem:[#allocation2 + $0x42] sm:$0x3] %vm206, -inf
        %214 = vst.msk [vmem:[#allocation2 + $0x5a] sm:$0x3] %vm206, -inf
        %vm215 = vcmask 15360
        %216 = vst.msk [vmem:[#allocation2] sm:$0xff] %vm215, -inf
        %217 = vst.msk [vmem:[#allocation2 + $0x8] sm:$0xff] %vm215, -inf
        %vm218 = vcmask 11264
        %219 = vst.msk [vmem:[#allocation2 + $0x10] sm:$0xf] %vm218, -inf
        %220 = vst.msk [vmem:[#allocation2 + $0x18] sm:$0xff] %vm215, -inf
        %221 = vst.msk [vmem:[#allocation2 + $0x20] sm:$0xff] %vm215, -inf
        %222 = vst.msk [vmem:[#allocation2 + $0x28] sm:$0xf] %vm218, -inf
        %223 = vst.msk [vmem:[#allocation2 + $0x30] sm:$0xff] %vm215, -inf
        %224 = vst.msk [vmem:[#allocation2 + $0x38] sm:$0xff] %vm215, -inf
        %225 = vst.msk [vmem:[#allocation2 + $0x40] sm:$0xf] %vm218, -inf
        %226 = vst.msk [vmem:[#allocation2 + $0x48] sm:$0xff] %vm215, -inf
        %227 = vst.msk [vmem:[#allocation2 + $0x50] sm:$0xff] %vm215, -inf
        %228 = vst.msk [vmem:[#allocation2 + $0x58] sm:$0xf] %vm218, -inf
        %vm229 = vcmask 162960
        %230 = vst.msk [vmem:[#allocation2] sm:$0xff] %vm229, -inf
        %231 = vst.msk [vmem:[#allocation2 + $0x8] sm:$0xff] %vm229, -inf
        %vm232 = vcmask 158864
        %233 = vst.msk [vmem:[#allocation2 + $0x10] sm:$0xf] %vm232, -inf
        %234 = vst.msk [vmem:[#allocation2 + $0x18] sm:$0xff] %vm229, -inf
        %235 = vst.msk [vmem:[#allocation2 + $0x20] sm:$0xff] %vm229, -inf
        %236 = vst.msk [vmem:[#allocation2 + $0x28] sm:$0xf] %vm232, -inf
        %237 = vst.msk [vmem:[#allocation2 + $0x30] sm:$0xff] %vm229, -inf
        %238 = vst.msk [vmem:[#allocation2 + $0x38] sm:$0xff] %vm229, -inf
        %239 = vst.msk [vmem:[#allocation2 + $0x40] sm:$0xf] %vm232, -inf
        %240 = vst.msk [vmem:[#allocation2 + $0x48] sm:$0xff] %vm229, -inf
        %241 = vst.msk [vmem:[#allocation2 + $0x50] sm:$0xff] %vm229, -inf
        %242 = vst.msk [vmem:[#allocation2 + $0x58] sm:$0xf] %vm232, -inf
        %v243 = vld [vmem:[%s176] sm:$0xff]
        %v244 = vld [vmem:[%s176 + $0x8] sm:$0xff]
        %vm245 = vcmp.ne.s32.totalorder %v243, 0
        %vm246 = vcmp.ne.s32.totalorder %v244, 0
        %vm247 = vcmp.ne.s32.totalorder %v243, 1
        %vm248 = vcmp.ne.s32.totalorder %v244, 1
        %vm249 = vcmp.ne.s32.totalorder %v243, 2
        %vm250 = vcmp.ne.s32.totalorder %v244, 2
        %vm251 = vcmp.ne.s32.totalorder %v243, 3
        %vm252 = vcmp.ne.s32.totalorder %v244, 3
        %v253 = vsel %vm245, 1, 0
        %v254 = vsel %vm246, 1, 0
        %v255 = vsel %vm247, 1, 0
        %v256 = vsel %vm248, 1, 0
        %v257 = vsel %vm249, 1, 0
        %v258 = vsel %vm250, 1, 0
        %v259 = vsel %vm251, 1, 0
        %v260 = vsel %vm252, 1, 0
        %v261 = vcvt.s32.f32 %v253
        %v262 = vcvt.s32.f32 %v254
        %v263 = vcvt.s32.f32 %v255
        %v264 = vcvt.s32.f32 %v256
        %v265 = vcvt.s32.f32 %v257
        %v266 = vcvt.s32.f32 %v258
        %v267 = vcvt.s32.f32 %v259
        %v268 = vcvt.s32.f32 %v260
        %277 = vrot.lane.b32.xlu0 %v261, 2
        %v278 = vpop.permute.xlu0 %277
        %279 = vrot.lane.b32.xlu0 %v262, 2
        %v280 = vpop.permute.xlu0 %279
        %281 = vrot.lane.b32.xlu0 %v263, 2
        %v282 = vpop.permute.xlu0 %281
        %283 = vrot.lane.b32.xlu0 %v264, 2
        %v284 = vpop.permute.xlu0 %283
        %285 = vrot.lane.b32.xlu0 %v265, 2
        %v286 = vpop.permute.xlu0 %285
        %287 = vrot.lane.b32.xlu0 %v266, 2
        %v288 = vpop.permute.xlu0 %287
        %289 = vrot.lane.b32.xlu0 %v267, 2
        %v290 = vpop.permute.xlu0 %289
        %291 = vrot.lane.b32.xlu0 %v268, 2
        %v292 = vpop.permute.xlu0 %291
        %vm301 = vcmask 146448
        %302 = vst.msk [vmem:[#allocation2 + $0x2] sm:$0xff] %vm301, %v278
        %303 = vst.msk [vmem:[#allocation2 + $0xa] sm:$0xff] %vm301, %v280
        %304 = vst.msk [vmem:[#allocation2 + $0x1a] sm:$0xff] %vm301, %v282
        %305 = vst.msk [vmem:[#allocation2 + $0x22] sm:$0xff] %vm301, %v284
        %306 = vst.msk [vmem:[#allocation2 + $0x32] sm:$0xff] %vm301, %v286
        %307 = vst.msk [vmem:[#allocation2 + $0x3a] sm:$0xff] %vm301, %v288
        %308 = vst.msk [vmem:[#allocation2 + $0x4a] sm:$0xff] %vm301, %v290
        %309 = vst.msk [vmem:[#allocation2 + $0x52] sm:$0xff] %vm301, %v292
        %v310 = vld [vmem:[#allocation2 + $0x2] sm:$0xff]
        %v311 = vld [vmem:[#allocation2 + $0xa] sm:$0xff]
        %v312 = vld [vmem:[#allocation2 + $0x1a] sm:$0xff]
        %v313 = vld [vmem:[#allocation2 + $0x22] sm:$0xff]
        %v314 = vld [vmem:[#allocation2 + $0x32] sm:$0xff]
        %v315 = vld [vmem:[#allocation2 + $0x3a] sm:$0xff]
        %v316 = vld [vmem:[#allocation2 + $0x4a] sm:$0xff]
        %v317 = vld [vmem:[#allocation2 + $0x52] sm:$0xff]
        %326 = vrot.lane.b32.xlu0 %v310, 127
        %v327 = vpop.permute.xlu0 %326
        %328 = vrot.lane.b32.xlu0 %v311, 127
        %v329 = vpop.permute.xlu0 %328
        %330 = vrot.lane.b32.xlu0 %v312, 127
        %v331 = vpop.permute.xlu0 %330
        %332 = vrot.lane.b32.xlu0 %v313, 127
        %v333 = vpop.permute.xlu0 %332
        %334 = vrot.lane.b32.xlu0 %v314, 127
        %v335 = vpop.permute.xlu0 %334
        %336 = vrot.lane.b32.xlu0 %v315, 127
        %v337 = vpop.permute.xlu0 %336
        %338 = vrot.lane.b32.xlu0 %v316, 127
        %v339 = vpop.permute.xlu0 %338
        %340 = vrot.lane.b32.xlu0 %v317, 127
        %v341 = vpop.permute.xlu0 %340
        %v350 = vmax.f32 %v310, %v327
        %v351 = vmax.f32 %v311, %v329
        %v352 = vmax.f32 %v312, %v331
        %v353 = vmax.f32 %v313, %v333
        %v354 = vmax.f32 %v314, %v335
        %v355 = vmax.f32 %v315, %v337
        %v356 = vmax.f32 %v316, %v339
        %v357 = vmax.f32 %v317, %v341
        %358 = vrot.lane.b32.xlu0 %v310, 126
        %v359 = vpop.permute.xlu0 %358
        %360 = vrot.lane.b32.xlu0 %v311, 126
        %v361 = vpop.permute.xlu0 %360
        %362 = vrot.lane.b32.xlu0 %v312, 126
        %v363 = vpop.permute.xlu0 %362
        %364 = vrot.lane.b32.xlu0 %v313, 126
        %v365 = vpop.permute.xlu0 %364
        %366 = vrot.lane.b32.xlu0 %v314, 126
        %v367 = vpop.permute.xlu0 %366
        %368 = vrot.lane.b32.xlu0 %v315, 126
        %v369 = vpop.permute.xlu0 %368
        %370 = vrot.lane.b32.xlu0 %v316, 126
        %v371 = vpop.permute.xlu0 %370
        %372 = vrot.lane.b32.xlu0 %v317, 126
        %v373 = vpop.permute.xlu0 %372
        %v382 = vmax.f32 %v350, %v359
        %v383 = vmax.f32 %v351, %v361
        %v384 = vmax.f32 %v352, %v363
        %v385 = vmax.f32 %v353, %v365
        %v386 = vmax.f32 %v354, %v367
        %v387 = vmax.f32 %v355, %v369
        %v388 = vmax.f32 %v356, %v371
        %v389 = vmax.f32 %v357, %v373
        %398 = vrot.lane.b32.xlu0 %v382, 1
        %v399 = vpop.permute.xlu0 %398
        %400 = vrot.lane.b32.xlu0 %v383, 1
        %v401 = vpop.permute.xlu0 %400
        %402 = vrot.lane.b32.xlu0 %v384, 1
        %v403 = vpop.permute.xlu0 %402
        %404 = vrot.lane.b32.xlu0 %v385, 1
        %v405 = vpop.permute.xlu0 %404
        %406 = vrot.lane.b32.xlu0 %v386, 1
        %v407 = vpop.permute.xlu0 %406
        %408 = vrot.lane.b32.xlu0 %v387, 1
        %v409 = vpop.permute.xlu0 %408
        %410 = vrot.lane.b32.xlu0 %v388, 1
        %v411 = vpop.permute.xlu0 %410
        %412 = vrot.lane.b32.xlu0 %v389, 1
        %v413 = vpop.permute.xlu0 %412
        %422 = vst.msk [vmem:[#allocation2 + $0x2] sm:$0xff] %vm301, %v399
        %423 = vst.msk [vmem:[#allocation2 + $0xa] sm:$0xff] %vm301, %v401
        %424 = vst.msk [vmem:[#allocation2 + $0x1a] sm:$0xff] %vm301, %v403
        %425 = vst.msk [vmem:[#allocation2 + $0x22] sm:$0xff] %vm301, %v405
        %426 = vst.msk [vmem:[#allocation2 + $0x32] sm:$0xff] %vm301, %v407
        %427 = vst.msk [vmem:[#allocation2 + $0x3a] sm:$0xff] %vm301, %v409
        %428 = vst.msk [vmem:[#allocation2 + $0x4a] sm:$0xff] %vm301, %v411
        %429 = vst.msk [vmem:[#allocation2 + $0x52] sm:$0xff] %vm301, %v413
        %v430 = vld [vmem:[#allocation2 + $0x1] sm:$0xff]
        %v431 = vld [vmem:[#allocation2 + $0x9] sm:$0xff]
        %v432 = vld [vmem:[#allocation2 + $0x19] sm:$0xff]
        %v433 = vld [vmem:[#allocation2 + $0x21] sm:$0xff]
        %v434 = vld [vmem:[#allocation2 + $0x31] sm:$0xff]
        %v435 = vld [vmem:[#allocation2 + $0x39] sm:$0xff]
        %v436 = vld [vmem:[#allocation2 + $0x49] sm:$0xff]
        %v437 = vld [vmem:[#allocation2 + $0x51] sm:$0xff]
        %v438 = vld [vmem:[#allocation2 + $0x2] sm:$0xff]
        %v439 = vld [vmem:[#allocation2 + $0xa] sm:$0xff]
        %v440 = vld [vmem:[#allocation2 + $0x1a] sm:$0xff]
        %v441 = vld [vmem:[#allocation2 + $0x22] sm:$0xff]
        %v442 = vld [vmem:[#allocation2 + $0x32] sm:$0xff]
        %v443 = vld [vmem:[#allocation2 + $0x3a] sm:$0xff]
        %v444 = vld [vmem:[#allocation2 + $0x4a] sm:$0xff]
        %v445 = vld [vmem:[#allocation2 + $0x52] sm:$0xff]
        %v446 = vmax.f32 %v430, %v438
        %v447 = vmax.f32 %v431, %v439
        %v448 = vmax.f32 %v432, %v440
        %v449 = vmax.f32 %v433, %v441
        %v450 = vmax.f32 %v434, %v442
        %v451 = vmax.f32 %v435, %v443
        %v452 = vmax.f32 %v436, %v444
        %v453 = vmax.f32 %v437, %v445
        %v454 = vld [vmem:[#allocation2 + $0x3] sm:$0xff]
        %v455 = vld [vmem:[#allocation2 + $0xb] sm:$0xff]
        %v456 = vld [vmem:[#allocation2 + $0x1b] sm:$0xff]
        %v457 = vld [vmem:[#allocation2 + $0x23] sm:$0xff]
        %v458 = vld [vmem:[#allocation2 + $0x33] sm:$0xff]
        %v459 = vld [vmem:[#allocation2 + $0x3b] sm:$0xff]
        %v460 = vld [vmem:[#allocation2 + $0x4b] sm:$0xff]
        %v461 = vld [vmem:[#allocation2 + $0x53] sm:$0xff]
        %v462 = vmax.f32 %v446, %v454
        %v463 = vmax.f32 %v447, %v455
        %v464 = vmax.f32 %v448, %v456
        %v465 = vmax.f32 %v449, %v457
        %v466 = vmax.f32 %v450, %v458
        %v467 = vmax.f32 %v451, %v459
        %v468 = vmax.f32 %v452, %v460
        %v469 = vmax.f32 %v453, %v461
        %v470 = vsub.f32 %v462, %v278
        %v471 = vsub.f32 %v463, %v280
        %v472 = vsub.f32 %v464, %v282
        %v473 = vsub.f32 %v465, %v284
        %v474 = vsub.f32 %v466, %v286
        %v475 = vsub.f32 %v467, %v288
        %v476 = vsub.f32 %v468, %v290
        %v477 = vsub.f32 %v469, %v292
        %478 = vst.msk [vmem:[#allocation2 + $0x2] sm:$0xff] %vm301, %v470
        %479 = vst.msk [vmem:[#allocation2 + $0xa] sm:$0xff] %vm301, %v471
        %480 = vst.msk [vmem:[#allocation2 + $0x1a] sm:$0xff] %vm301, %v472
        %481 = vst.msk [vmem:[#allocation2 + $0x22] sm:$0xff] %vm301, %v473
        %482 = vst.msk [vmem:[#allocation2 + $0x32] sm:$0xff] %vm301, %v474
        %483 = vst.msk [vmem:[#allocation2 + $0x3a] sm:$0xff] %vm301, %v475
        %484 = vst.msk [vmem:[#allocation2 + $0x4a] sm:$0xff] %vm301, %v476
        %485 = vst.msk [vmem:[#allocation2 + $0x52] sm:$0xff] %vm301, %v477
        %v486 = vld [vmem:[#allocation2 + $0x2] sm:$0xff]
        %v487 = vld [vmem:[#allocation2 + $0xa] sm:$0xff]
        %v488 = vld [vmem:[#allocation2 + $0x1a] sm:$0xff]
        %v489 = vld [vmem:[#allocation2 + $0x22] sm:$0xff]
        %v490 = vld [vmem:[#allocation2 + $0x32] sm:$0xff]
        %v491 = vld [vmem:[#allocation2 + $0x3a] sm:$0xff]
        %v492 = vld [vmem:[#allocation2 + $0x4a] sm:$0xff]
        %v493 = vld [vmem:[#allocation2 + $0x52] sm:$0xff]
        %502 = vrot.lane.b32.xlu0 %v486, 127
        %v503 = vpop.permute.xlu0 %502
        %504 = vrot.lane.b32.xlu0 %v487, 127
        %v505 = vpop.permute.xlu0 %504
        %506 = vrot.lane.b32.xlu0 %v488, 127
        %v507 = vpop.permute.xlu0 %506
        %508 = vrot.lane.b32.xlu0 %v489, 127
        %v509 = vpop.permute.xlu0 %508
        %510 = vrot.lane.b32.xlu0 %v490, 127
        %v511 = vpop.permute.xlu0 %510
        %512 = vrot.lane.b32.xlu0 %v491, 127
        %v513 = vpop.permute.xlu0 %512
        %514 = vrot.lane.b32.xlu0 %v492, 127
        %v515 = vpop.permute.xlu0 %514
        %516 = vrot.lane.b32.xlu0 %v493, 127
        %v517 = vpop.permute.xlu0 %516
        %v526 = vmax.f32 %v486, %v503
        %v527 = vmax.f32 %v487, %v505
        %v528 = vmax.f32 %v488, %v507
        %v529 = vmax.f32 %v489, %v509
        %v530 = vmax.f32 %v490, %v511
        %v531 = vmax.f32 %v491, %v513
        %v532 = vmax.f32 %v492, %v515
        %v533 = vmax.f32 %v493, %v517
        %534 = vrot.lane.b32.xlu0 %v486, 126
        %v535 = vpop.permute.xlu0 %534
        %536 = vrot.lane.b32.xlu0 %v487, 126
        %v537 = vpop.permute.xlu0 %536
        %538 = vrot.lane.b32.xlu0 %v488, 126
        %v539 = vpop.permute.xlu0 %538
        %540 = vrot.lane.b32.xlu0 %v489, 126
        %v541 = vpop.permute.xlu0 %540
        %542 = vrot.lane.b32.xlu0 %v490, 126
        %v543 = vpop.permute.xlu0 %542
        %544 = vrot.lane.b32.xlu0 %v491, 126
        %v545 = vpop.permute.xlu0 %544
        %546 = vrot.lane.b32.xlu0 %v492, 126
        %v547 = vpop.permute.xlu0 %546
        %548 = vrot.lane.b32.xlu0 %v493, 126
        %v549 = vpop.permute.xlu0 %548
        %v558 = vmax.f32 %v526, %v535
        %v559 = vmax.f32 %v527, %v537
        %v560 = vmax.f32 %v528, %v539
        %v561 = vmax.f32 %v529, %v541
        %v562 = vmax.f32 %v530, %v543
        %v563 = vmax.f32 %v531, %v545
        %v564 = vmax.f32 %v532, %v547
        %v565 = vmax.f32 %v533, %v549
        %566 = vrot.lane.b32.xlu0 %v486, 125
        %v567 = vpop.permute.xlu0 %566
        %568 = vrot.lane.b32.xlu0 %v487, 125
        %v569 = vpop.permute.xlu0 %568
        %570 = vrot.lane.b32.xlu0 %v488, 125
        %v571 = vpop.permute.xlu0 %570
        %572 = vrot.lane.b32.xlu0 %v489, 125
        %v573 = vpop.permute.xlu0 %572
        %574 = vrot.lane.b32.xlu0 %v490, 125
        %v575 = vpop.permute.xlu0 %574
        %576 = vrot.lane.b32.xlu0 %v491, 125
        %v577 = vpop.permute.xlu0 %576
        %578 = vrot.lane.b32.xlu0 %v492, 125
        %v579 = vpop.permute.xlu0 %578
        %580 = vrot.lane.b32.xlu0 %v493, 125
        %v581 = vpop.permute.xlu0 %580
        %v590 = vmax.f32 %v558, %v567
        %v591 = vmax.f32 %v559, %v569
        %v592 = vmax.f32 %v560, %v571
        %v593 = vmax.f32 %v561, %v573
        %v594 = vmax.f32 %v562, %v575
        %v595 = vmax.f32 %v563, %v577
        %v596 = vmax.f32 %v564, %v579
        %v597 = vmax.f32 %v565, %v581
        %598 = vrot.lane.b32.xlu0 %v486, 124
        %v599 = vpop.permute.xlu0 %598
        %600 = vrot.lane.b32.xlu0 %v487, 124
        %v601 = vpop.permute.xlu0 %600
        %602 = vrot.lane.b32.xlu0 %v488, 124
        %v603 = vpop.permute.xlu0 %602
        %604 = vrot.lane.b32.xlu0 %v489, 124
        %v605 = vpop.permute.xlu0 %604
        %606 = vrot.lane.b32.xlu0 %v490, 124
        %v607 = vpop.permute.xlu0 %606
        %608 = vrot.lane.b32.xlu0 %v491, 124
        %v609 = vpop.permute.xlu0 %608
        %610 = vrot.lane.b32.xlu0 %v492, 124
        %v611 = vpop.permute.xlu0 %610
        %612 = vrot.lane.b32.xlu0 %v493, 124
        %v613 = vpop.permute.xlu0 %612
        %v622 = vmax.f32 %v590, %v599
        %v623 = vmax.f32 %v591, %v601
        %v624 = vmax.f32 %v592, %v603
        %v625 = vmax.f32 %v593, %v605
        %v626 = vmax.f32 %v594, %v607
        %v627 = vmax.f32 %v595, %v609
        %v628 = vmax.f32 %v596, %v611
        %v629 = vmax.f32 %v597, %v613
        %638 = vrot.lane.b32.xlu0 %v622, 2
        %v639 = vpop.permute.xlu0 %638
        %640 = vrot.lane.b32.xlu0 %v623, 2
        %v641 = vpop.permute.xlu0 %640
        %642 = vrot.lane.b32.xlu0 %v624, 2
        %v643 = vpop.permute.xlu0 %642
        %644 = vrot.lane.b32.xlu0 %v625, 2
        %v645 = vpop.permute.xlu0 %644
        %646 = vrot.lane.b32.xlu0 %v626, 2
        %v647 = vpop.permute.xlu0 %646
        %648 = vrot.lane.b32.xlu0 %v627, 2
        %v649 = vpop.permute.xlu0 %648
        %650 = vrot.lane.b32.xlu0 %v628, 2
        %v651 = vpop.permute.xlu0 %650
        %652 = vrot.lane.b32.xlu0 %v629, 2
        %v653 = vpop.permute.xlu0 %652
        %662 = vst.msk [vmem:[#allocation2 + $0x2] sm:$0xff] %vm301, %v639
        %663 = vst.msk [vmem:[#allocation2 + $0xa] sm:$0xff] %vm301, %v641
        %664 = vst.msk [vmem:[#allocation2 + $0x1a] sm:$0xff] %vm301, %v643
        %665 = vst.msk [vmem:[#allocation2 + $0x22] sm:$0xff] %vm301, %v645
        %666 = vst.msk [vmem:[#allocation2 + $0x32] sm:$0xff] %vm301, %v647
        %667 = vst.msk [vmem:[#allocation2 + $0x3a] sm:$0xff] %vm301, %v649
        %668 = vst.msk [vmem:[#allocation2 + $0x4a] sm:$0xff] %vm301, %v651
        %669 = vst.msk [vmem:[#allocation2 + $0x52] sm:$0xff] %vm301, %v653
        %v670 = vld [vmem:[#allocation2] sm:$0xff]
        %v671 = vld [vmem:[#allocation2 + $0x8] sm:$0xff]
        %v672 = vld [vmem:[#allocation2 + $0x18] sm:$0xff]
        %v673 = vld [vmem:[#allocation2 + $0x20] sm:$0xff]
        %v674 = vld [vmem:[#allocation2 + $0x30] sm:$0xff]
        %v675 = vld [vmem:[#allocation2 + $0x38] sm:$0xff]
        %v676 = vld [vmem:[#allocation2 + $0x48] sm:$0xff]
        %v677 = vld [vmem:[#allocation2 + $0x50] sm:$0xff]
        %v678 = vld [vmem:[#allocation2 + $0x1] sm:$0xff]
        %v679 = vld [vmem:[#allocation2 + $0x9] sm:$0xff]
        %v680 = vld [vmem:[#allocation2 + $0x19] sm:$0xff]
        %v681 = vld [vmem:[#allocation2 + $0x21] sm:$0xff]
        %v682 = vld [vmem:[#allocation2 + $0x31] sm:$0xff]
        %v683 = vld [vmem:[#allocation2 + $0x39] sm:$0xff]
        %v684 = vld [vmem:[#allocation2 + $0x49] sm:$0xff]
        %v685 = vld [vmem:[#allocation2 + $0x51] sm:$0xff]
        %v686 = vmax.f32 %v670, %v678
        %v687 = vmax.f32 %v671, %v679
        %v688 = vmax.f32 %v672, %v680
        %v689 = vmax.f32 %v673, %v681
        %v690 = vmax.f32 %v674, %v682
        %v691 = vmax.f32 %v675, %v683
        %v692 = vmax.f32 %v676, %v684
        %v693 = vmax.f32 %v677, %v685
        %v694 = vld [vmem:[#allocation2 + $0x2] sm:$0xff]
        %v695 = vld [vmem:[#allocation2 + $0xa] sm:$0xff]
        %v696 = vld [vmem:[#allocation2 + $0x1a] sm:$0xff]
        %v697 = vld [vmem:[#allocation2 + $0x22] sm:$0xff]
        %v698 = vld [vmem:[#allocation2 + $0x32] sm:$0xff]
        %v699 = vld [vmem:[#allocation2 + $0x3a] sm:$0xff]
        %v700 = vld [vmem:[#allocation2 + $0x4a] sm:$0xff]
        %v701 = vld [vmem:[#allocation2 + $0x52] sm:$0xff]
        %v702 = vmax.f32 %v686, %v694
        %v703 = vmax.f32 %v687, %v695
        %v704 = vmax.f32 %v688, %v696
        %v705 = vmax.f32 %v689, %v697
        %v706 = vmax.f32 %v690, %v698
        %v707 = vmax.f32 %v691, %v699
        %v708 = vmax.f32 %v692, %v700
        %v709 = vmax.f32 %v693, %v701
        %v710 = vld [vmem:[#allocation2 + $0x3] sm:$0xff]
        %v711 = vld [vmem:[#allocation2 + $0xb] sm:$0xff]
        %v712 = vld [vmem:[#allocation2 + $0x1b] sm:$0xff]
        %v713 = vld [vmem:[#allocation2 + $0x23] sm:$0xff]
        %v714 = vld [vmem:[#allocation2 + $0x33] sm:$0xff]
        %v715 = vld [vmem:[#allocation2 + $0x3b] sm:$0xff]
        %v716 = vld [vmem:[#allocation2 + $0x4b] sm:$0xff]
        %v717 = vld [vmem:[#allocation2 + $0x53] sm:$0xff]
        %v718 = vmax.f32 %v702, %v710
        %v719 = vmax.f32 %v703, %v711
        %v720 = vmax.f32 %v704, %v712
        %v721 = vmax.f32 %v705, %v713
        %v722 = vmax.f32 %v706, %v714
        %v723 = vmax.f32 %v707, %v715
        %v724 = vmax.f32 %v708, %v716
        %v725 = vmax.f32 %v709, %v717
        %v726 = vld [vmem:[#allocation2 + $0x4] sm:$0xff]
        %v727 = vld [vmem:[#allocation2 + $0xc] sm:$0xff]
        %v728 = vld [vmem:[#allocation2 + $0x1c] sm:$0xff]
        %v729 = vld [vmem:[#allocation2 + $0x24] sm:$0xff]
        %v730 = vld [vmem:[#allocation2 + $0x34] sm:$0xff]
        %v731 = vld [vmem:[#allocation2 + $0x3c] sm:$0xff]
        %v732 = vld [vmem:[#allocation2 + $0x4c] sm:$0xff]
        %v733 = vld [vmem:[#allocation2 + $0x54] sm:$0xff]
        %v734 = vmax.f32 %v718, %v726
        %v735 = vmax.f32 %v719, %v727
        %v736 = vmax.f32 %v720, %v728
        %v737 = vmax.f32 %v721, %v729
        %v738 = vmax.f32 %v722, %v730
        %v739 = vmax.f32 %v723, %v731
        %v740 = vmax.f32 %v724, %v732
        %v741 = vmax.f32 %v725, %v733
        %750 = vrot.lane.b32.xlu0 %v470, 126
        %v751 = vpop.permute.xlu0 %750
        %752 = vrot.lane.b32.xlu0 %v471, 126
        %v753 = vpop.permute.xlu0 %752
        %754 = vrot.lane.b32.xlu0 %v472, 126
        %v755 = vpop.permute.xlu0 %754
        %756 = vrot.lane.b32.xlu0 %v473, 126
        %v757 = vpop.permute.xlu0 %756
        %758 = vrot.lane.b32.xlu0 %v474, 126
        %v759 = vpop.permute.xlu0 %758
        %760 = vrot.lane.b32.xlu0 %v475, 126
        %v761 = vpop.permute.xlu0 %760
        %762 = vrot.lane.b32.xlu0 %v476, 126
        %v763 = vpop.permute.xlu0 %762
        %764 = vrot.lane.b32.xlu0 %v477, 126
        %v765 = vpop.permute.xlu0 %764
        %vm774 = vcmask 130048
        %v775 = vsel %vm774, %v751, 0.0
        %776 = vadd.xlane.f32.xlu0 %v775
        %v777 = vpop.xlane.xlu0 %776
        %v778 = vsel %vm774, %v753, 0.0
        %779 = vadd.xlane.f32.xlu0 %v778
        %v780 = vpop.xlane.xlu0 %779
        %v781 = vsel %vm774, %v755, 0.0
        %782 = vadd.xlane.f32.xlu0 %v781
        %v783 = vpop.xlane.xlu0 %782
        %v784 = vsel %vm774, %v757, 0.0
        %785 = vadd.xlane.f32.xlu0 %v784
        %v786 = vpop.xlane.xlu0 %785
        %v787 = vsel %vm774, %v759, 0.0
        %788 = vadd.xlane.f32.xlu0 %v787
        %v789 = vpop.xlane.xlu0 %788
        %v790 = vsel %vm774, %v761, 0.0
        %791 = vadd.xlane.f32.xlu0 %v790
        %v792 = vpop.xlane.xlu0 %791
        %v793 = vsel %vm774, %v763, 0.0
        %794 = vadd.xlane.f32.xlu0 %v793
        %v795 = vpop.xlane.xlu0 %794
        %v796 = vsel %vm774, %v765, 0.0
        %797 = vadd.xlane.f32.xlu0 %v796
        %v798 = vpop.xlane.xlu0 %797
        %v807 = vlaneseq
        %v808 = vand.u32 %v807, 127
        %v809 = vperm.slane %v777, %v808
        %v810 = vadd.s32 %v808, 4294967288
        %v811 = vperm.slane %v780, %v810
        %vm812 = vcmask 130112
        %v813 = vsel %vm812, %v811, %v809
        %v814 = vperm.slane %v783, %v808
        %v815 = vperm.slane %v786, %v810
        %v816 = vsel %vm812, %v815, %v814
        %v817 = vperm.slane %v789, %v808
        %v818 = vperm.slane %v792, %v810
        %v819 = vsel %vm812, %v818, %v817
        %v820 = vperm.slane %v795, %v808
        %v821 = vperm.slane %v798, %v810
        %v822 = vsel %vm812, %v821, %v820
        %vm823 = vcmask 1041409
        %v824 = vsel %vm823, %v816, %v813
        %vm825 = vcmask 1042434
        %v826 = vsel %vm825, %v819, %v824
        %vm827 = vcmask 1043459
        %v828 = vsel %vm827, %v822, %v826
        %vm830 = vcmask 125952
        %v831 = vsel %vm830, %v828, 0.0
        %832 = vadd.xlane.f32.xlu0 %v831
        %v833 = vpop.xlane.xlu0 %832
        %v834 = vld [vmem:[%s166] sm:$0xff]
        %v835 = vld [vmem:[%s166 + $0x8] sm:$0xff]
        %v836 = vld [vmem:[%s166 + $0x10] sm:$0xff]
        %v837 = vld [vmem:[%s166 + $0x18] sm:$0xff]
        %v838 = vld [vmem:[%s166 + $0x20] sm:$0xff]
        %v839 = vld [vmem:[%s166 + $0x28] sm:$0xff]
        %v840 = vld [vmem:[%s166 + $0x30] sm:$0xff]
        %v841 = vld [vmem:[%s166 + $0x38] sm:$0xff]
        %v842 = vsel %vm774, %v834, -inf
        %v843 = vsel %vm774, %v836, -inf
        %v844 = vsel %vm774, %v838, -inf
        %v845 = vmax.f32 %v842, %v844
        %v846 = vsel %vm774, %v840, -inf
        %v847 = vmax.f32 %v843, %v846
        %v848 = vmax.f32 %v845, %v847
        %v849 = vsel %vm774, %v835, -inf
        %v850 = vsel %vm774, %v837, -inf
        %v851 = vsel %vm774, %v839, -inf
        %v852 = vmax.f32 %v849, %v851
        %v853 = vsel %vm774, %v841, -inf
        %v854 = vmax.f32 %v850, %v853
        %v855 = vmax.f32 %v852, %v854
        %v856 = vsub.f32 %v834, %v848
        %v857 = vsub.f32 %v835, %v855
        %v858 = vsub.f32 %v836, %v848
        %v859 = vsub.f32 %v837, %v855
        %v860 = vsub.f32 %v838, %v848
        %v861 = vsub.f32 %v839, %v855
        %v862 = vsub.f32 %v840, %v848
        %v863 = vsub.f32 %v841, %v855
        %v864 = vmul.f32 %v856, 1.442695
        %v865 = vpow.pop %v864
        %v866 = vmul.f32 %v857, 1.442695
        %v867 = vpow.pop %v866
        %v868 = vmul.f32 %v858, 1.442695
        %v869 = vpow.pop %v868
        %v870 = vmul.f32 %v859, 1.442695
        %v871 = vpow.pop %v870
        %v872 = vmul.f32 %v860, 1.442695
        %v873 = vpow.pop %v872
        %v874 = vmul.f32 %v861, 1.442695
        %v875 = vpow.pop %v874
        %v876 = vmul.f32 %v862, 1.442695
        %v877 = vpow.pop %v876
        %v878 = vmul.f32 %v863, 1.442695
        %v879 = vpow.pop %v878
        %v880 = vsel %vm774, %v865, 0.0
        %v881 = vsel %vm774, %v869, 0.0
        %v882 = vadd.f32 %v880, %v881
        %v883 = vsel %vm774, %v873, 0.0
        %v884 = vadd.f32 %v882, %v883
        %v885 = vsel %vm774, %v877, 0.0
        %v886 = vadd.f32 %v884, %v885
        %v887 = vsel %vm774, %v867, 0.0
        %v888 = vsel %vm774, %v871, 0.0
        %v889 = vadd.f32 %v887, %v888
        %v890 = vsel %vm774, %v875, 0.0
        %v891 = vadd.f32 %v889, %v890
        %v892 = vsel %vm774, %v879, 0.0
        %v893 = vadd.f32 %v891, %v892
        %v894 = vrcp.pop %v886
        %v895 = vmul.f32 %v886, %v894
        %v896 = vsub.f32 1.0, %v895
        %v897 = vmul.f32 %v894, %v896
        %v898 = vadd.f32 %v894, %v897
        %vm899 = vweird.f32 %v886
        %vm900 = vweird.f32 %v894
        %vm901 = vmor %vm899, %vm900
        %v902 = vsel %vm901, %v894, %v898
        %v903 = vand.u32 2147483647, %v886
        %vm904 = vcmp.eq.f32.partialorder %v903, 8.507059e+37
        %v905 = vand.u32 %v886, 2147483648
        %v906 = vor.u32 1.1754944e-38, %v905
        %v907 = vsel %vm904, %v906, %v902
        %v908 = vrcp.pop %v893
        %v909 = vmul.f32 %v893, %v908
        %v910 = vsub.f32 1.0, %v909
        %v911 = vmul.f32 %v908, %v910
        %v912 = vadd.f32 %v908, %v911
        %vm913 = vweird.f32 %v893
        %vm914 = vweird.f32 %v908
        %vm915 = vmor %vm913, %vm914
        %v916 = vsel %vm915, %v908, %v912
        %v917 = vand.u32 2147483647, %v893
        %vm918 = vcmp.eq.f32.partialorder %v917, 8.507059e+37
        %v919 = vand.u32 %v893, 2147483648
        %v920 = vor.u32 1.1754944e-38, %v919
        %v921 = vsel %vm918, %v920, %v916
        %v922 = vmul.f32 %v865, %v907
        %v923 = vmul.f32 %v867, %v921
        %v924 = vmul.f32 %v869, %v907
        %v925 = vmul.f32 %v871, %v921
        %v926 = vmul.f32 %v873, %v907
        %v927 = vmul.f32 %v875, %v921
        %v928 = vmul.f32 %v877, %v907
        %v929 = vmul.f32 %v879, %v921
        %v930 = vsub.f32 1.0, %v922
        %v931 = vsub.f32 1.0, %v923
        %v932 = vsub.f32 1.0, %v924
        %v933 = vsub.f32 1.0, %v925
        %v934 = vsub.f32 1.0, %v926
        %v935 = vsub.f32 1.0, %v927
        %v936 = vsub.f32 1.0, %v928
        %v937 = vsub.f32 1.0, %v929
        %946 = vrot.lane.b32.xlu0 %v930, 2
        %v947 = vpop.permute.xlu0 %946
        %948 = vrot.lane.b32.xlu0 %v931, 2
        %v949 = vpop.permute.xlu0 %948
        %950 = vrot.lane.b32.xlu0 %v932, 2
        %v951 = vpop.permute.xlu0 %950
        %952 = vrot.lane.b32.xlu0 %v933, 2
        %v953 = vpop.permute.xlu0 %952
        %954 = vrot.lane.b32.xlu0 %v934, 2
        %v955 = vpop.permute.xlu0 %954
        %956 = vrot.lane.b32.xlu0 %v935, 2
        %v957 = vpop.permute.xlu0 %956
        %958 = vrot.lane.b32.xlu0 %v936, 2
        %v959 = vpop.permute.xlu0 %958
        %960 = vrot.lane.b32.xlu0 %v937, 2
        %v961 = vpop.permute.xlu0 %960
        %970 = vst.msk [vmem:[#allocation2 + $0x2] sm:$0xff] %vm301, %v947
        %971 = vst.msk [vmem:[#allocation2 + $0xa] sm:$0xff] %vm301, %v949
        %972 = vst.msk [vmem:[#allocation2 + $0x1a] sm:$0xff] %vm301, %v951
        %973 = vst.msk [vmem:[#allocation2 + $0x22] sm:$0xff] %vm301, %v953
        %974 = vst.msk [vmem:[#allocation2 + $0x32] sm:$0xff] %vm301, %v955
        %975 = vst.msk [vmem:[#allocation2 + $0x3a] sm:$0xff] %vm301, %v957
        %976 = vst.msk [vmem:[#allocation2 + $0x4a] sm:$0xff] %vm301, %v959
        %977 = vst.msk [vmem:[#allocation2 + $0x52] sm:$0xff] %vm301, %v961
        %v978 = vld [vmem:[#allocation2 + $0x2] sm:$0xff]
        %v979 = vld [vmem:[#allocation2 + $0xa] sm:$0xff]
        %v980 = vld [vmem:[#allocation2 + $0x1a] sm:$0xff]
        %v981 = vld [vmem:[#allocation2 + $0x22] sm:$0xff]
        %v982 = vld [vmem:[#allocation2 + $0x32] sm:$0xff]
        %v983 = vld [vmem:[#allocation2 + $0x3a] sm:$0xff]
        %v984 = vld [vmem:[#allocation2 + $0x4a] sm:$0xff]
        %v985 = vld [vmem:[#allocation2 + $0x52] sm:$0xff]
        %994 = vrot.lane.b32.xlu0 %v978, 127
        %v995 = vpop.permute.xlu0 %994
        %996 = vrot.lane.b32.xlu0 %v979, 127
        %v997 = vpop.permute.xlu0 %996
        %998 = vrot.lane.b32.xlu0 %v980, 127
        %v999 = vpop.permute.xlu0 %998
        %1000 = vrot.lane.b32.xlu0 %v981, 127
        %v1001 = vpop.permute.xlu0 %1000
        %1002 = vrot.lane.b32.xlu0 %v982, 127
        %v1003 = vpop.permute.xlu0 %1002
        %1004 = vrot.lane.b32.xlu0 %v983, 127
        %v1005 = vpop.permute.xlu0 %1004
        %1006 = vrot.lane.b32.xlu0 %v984, 127
        %v1007 = vpop.permute.xlu0 %1006
        %1008 = vrot.lane.b32.xlu0 %v985, 127
        %v1009 = vpop.permute.xlu0 %1008
        %v1018 = vmax.f32 %v978, %v995
        %v1019 = vmax.f32 %v979, %v997
        %v1020 = vmax.f32 %v980, %v999
        %v1021 = vmax.f32 %v981, %v1001
        %v1022 = vmax.f32 %v982, %v1003
        %v1023 = vmax.f32 %v983, %v1005
        %v1024 = vmax.f32 %v984, %v1007
        %v1025 = vmax.f32 %v985, %v1009
        %1026 = vrot.lane.b32.xlu0 %v978, 126
        %v1027 = vpop.permute.xlu0 %1026
        %1028 = vrot.lane.b32.xlu0 %v979, 126
        %v1029 = vpop.permute.xlu0 %1028
        %1030 = vrot.lane.b32.xlu0 %v980, 126
        %v1031 = vpop.permute.xlu0 %1030
        %1032 = vrot.lane.b32.xlu0 %v981, 126
        %v1033 = vpop.permute.xlu0 %1032
        %1034 = vrot.lane.b32.xlu0 %v982, 126
        %v1035 = vpop.permute.xlu0 %1034
        %1036 = vrot.lane.b32.xlu0 %v983, 126
        %v1037 = vpop.permute.xlu0 %1036
        %1038 = vrot.lane.b32.xlu0 %v984, 126
        %v1039 = vpop.permute.xlu0 %1038
        %1040 = vrot.lane.b32.xlu0 %v985, 126
        %v1041 = vpop.permute.xlu0 %1040
        %v1050 = vmax.f32 %v1018, %v1027
        %v1051 = vmax.f32 %v1019, %v1029
        %v1052 = vmax.f32 %v1020, %v1031
        %v1053 = vmax.f32 %v1021, %v1033
        %v1054 = vmax.f32 %v1022, %v1035
        %v1055 = vmax.f32 %v1023, %v1037
        %v1056 = vmax.f32 %v1024, %v1039
        %v1057 = vmax.f32 %v1025, %v1041
        %1066 = vrot.lane.b32.xlu0 %v1050, 1
        %v1067 = vpop.permute.xlu0 %1066
        %1068 = vrot.lane.b32.xlu0 %v1051, 1
        %v1069 = vpop.permute.xlu0 %1068
        %1070 = vrot.lane.b32.xlu0 %v1052, 1
        %v1071 = vpop.permute.xlu0 %1070
        %1072 = vrot.lane.b32.xlu0 %v1053, 1
        %v1073 = vpop.permute.xlu0 %1072
        %1074 = vrot.lane.b32.xlu0 %v1054, 1
        %v1075 = vpop.permute.xlu0 %1074
        %1076 = vrot.lane.b32.xlu0 %v1055, 1
        %v1077 = vpop.permute.xlu0 %1076
        %1078 = vrot.lane.b32.xlu0 %v1056, 1
        %v1079 = vpop.permute.xlu0 %1078
        %1080 = vrot.lane.b32.xlu0 %v1057, 1
        %v1081 = vpop.permute.xlu0 %1080
        %1090 = vst.msk [vmem:[#allocation2 + $0x2] sm:$0xff] %vm301, %v1067
        %1091 = vst.msk [vmem:[#allocation2 + $0xa] sm:$0xff] %vm301, %v1069
        %1092 = vst.msk [vmem:[#allocation2 + $0x1a] sm:$0xff] %vm301, %v1071
        %1093 = vst.msk [vmem:[#allocation2 + $0x22] sm:$0xff] %vm301, %v1073
        %1094 = vst.msk [vmem:[#allocation2 + $0x32] sm:$0xff] %vm301, %v1075
        %1095 = vst.msk [vmem:[#allocation2 + $0x3a] sm:$0xff] %vm301, %v1077
        %1096 = vst.msk [vmem:[#allocation2 + $0x4a] sm:$0xff] %vm301, %v1079
        %1097 = vst.msk [vmem:[#allocation2 + $0x52] sm:$0xff] %vm301, %v1081
        %v1098 = vld [vmem:[#allocation2 + $0x1] sm:$0xff]
        %v1099 = vld [vmem:[#allocation2 + $0x9] sm:$0xff]
        %v1100 = vld [vmem:[#allocation2 + $0x19] sm:$0xff]
        %v1101 = vld [vmem:[#allocation2 + $0x21] sm:$0xff]
        %v1102 = vld [vmem:[#allocation2 + $0x31] sm:$0xff]
        %v1103 = vld [vmem:[#allocation2 + $0x39] sm:$0xff]
        %v1104 = vld [vmem:[#allocation2 + $0x49] sm:$0xff]
        %v1105 = vld [vmem:[#allocation2 + $0x51] sm:$0xff]
        %v1106 = vld [vmem:[#allocation2 + $0x2] sm:$0xff]
        %v1107 = vld [vmem:[#allocation2 + $0xa] sm:$0xff]
        %v1108 = vld [vmem:[#allocation2 + $0x1a] sm:$0xff]
        %v1109 = vld [vmem:[#allocation2 + $0x22] sm:$0xff]
        %v1110 = vld [vmem:[#allocation2 + $0x32] sm:$0xff]
        %v1111 = vld [vmem:[#allocation2 + $0x3a] sm:$0xff]
        %v1112 = vld [vmem:[#allocation2 + $0x4a] sm:$0xff]
        %v1113 = vld [vmem:[#allocation2 + $0x52] sm:$0xff]
        %v1114 = vmax.f32 %v1098, %v1106
        %v1115 = vmax.f32 %v1099, %v1107
        %v1116 = vmax.f32 %v1100, %v1108
        %v1117 = vmax.f32 %v1101, %v1109
        %v1118 = vmax.f32 %v1102, %v1110
        %v1119 = vmax.f32 %v1103, %v1111
        %v1120 = vmax.f32 %v1104, %v1112
        %v1121 = vmax.f32 %v1105, %v1113
        %v1122 = vld [vmem:[#allocation2 + $0x3] sm:$0xff]
        %v1123 = vld [vmem:[#allocation2 + $0xb] sm:$0xff]
        %v1124 = vld [vmem:[#allocation2 + $0x1b] sm:$0xff]
        %v1125 = vld [vmem:[#allocation2 + $0x23] sm:$0xff]
        %v1126 = vld [vmem:[#allocation2 + $0x33] sm:$0xff]
        %v1127 = vld [vmem:[#allocation2 + $0x3b] sm:$0xff]
        %v1128 = vld [vmem:[#allocation2 + $0x4b] sm:$0xff]
        %v1129 = vld [vmem:[#allocation2 + $0x53] sm:$0xff]
        %v1130 = vmax.f32 %v1114, %v1122
        %v1131 = vmax.f32 %v1115, %v1123
        %v1132 = vmax.f32 %v1116, %v1124
        %v1133 = vmax.f32 %v1117, %v1125
        %v1134 = vmax.f32 %v1118, %v1126
        %v1135 = vmax.f32 %v1119, %v1127
        %v1136 = vmax.f32 %v1120, %v1128
        %v1137 = vmax.f32 %v1121, %v1129
        %v1138 = vsub.f32 %v1130, %v947
        %v1139 = vsub.f32 %v1131, %v949
        %v1140 = vsub.f32 %v1132, %v951
        %v1141 = vsub.f32 %v1133, %v953
        %v1142 = vsub.f32 %v1134, %v955
        %v1143 = vsub.f32 %v1135, %v957
        %v1144 = vsub.f32 %v1136, %v959
        %v1145 = vsub.f32 %v1137, %v961
        %v1146 = vmul.f32 %v1138, %v734
        %v1147 = vmul.f32 %v1139, %v735
        %v1148 = vmul.f32 %v1140, %v736
        %v1149 = vmul.f32 %v1141, %v737
        %v1150 = vmul.f32 %v1142, %v738
        %v1151 = vmul.f32 %v1143, %v739
        %v1152 = vmul.f32 %v1144, %v740
        %v1153 = vmul.f32 %v1145, %v741
        %1162 = vrot.lane.b32.xlu0 %v1146, 126
        %v1163 = vpop.permute.xlu0 %1162
        %1164 = vrot.lane.b32.xlu0 %v1147, 126
        %v1165 = vpop.permute.xlu0 %1164
        %1166 = vrot.lane.b32.xlu0 %v1148, 126
        %v1167 = vpop.permute.xlu0 %1166
        %1168 = vrot.lane.b32.xlu0 %v1149, 126
        %v1169 = vpop.permute.xlu0 %1168
        %1170 = vrot.lane.b32.xlu0 %v1150, 126
        %v1171 = vpop.permute.xlu0 %1170
        %1172 = vrot.lane.b32.xlu0 %v1151, 126
        %v1173 = vpop.permute.xlu0 %1172
        %1174 = vrot.lane.b32.xlu0 %v1152, 126
        %v1175 = vpop.permute.xlu0 %1174
        %1176 = vrot.lane.b32.xlu0 %v1153, 126
        %v1177 = vpop.permute.xlu0 %1176
        %v1186 = vsel %vm774, %v1163, 0.0
        %1187 = vadd.xlane.f32.xlu0 %v1186
        %v1188 = vpop.xlane.xlu0 %1187
        %v1189 = vsel %vm774, %v1165, 0.0
        %1190 = vadd.xlane.f32.xlu0 %v1189
        %v1191 = vpop.xlane.xlu0 %1190
        %v1192 = vsel %vm774, %v1167, 0.0
        %1193 = vadd.xlane.f32.xlu0 %v1192
        %v1194 = vpop.xlane.xlu0 %1193
        %v1195 = vsel %vm774, %v1169, 0.0
        %1196 = vadd.xlane.f32.xlu0 %v1195
        %v1197 = vpop.xlane.xlu0 %1196
        %v1198 = vsel %vm774, %v1171, 0.0
        %1199 = vadd.xlane.f32.xlu0 %v1198
        %v1200 = vpop.xlane.xlu0 %1199
        %v1201 = vsel %vm774, %v1173, 0.0
        %1202 = vadd.xlane.f32.xlu0 %v1201
        %v1203 = vpop.xlane.xlu0 %1202
        %v1204 = vsel %vm774, %v1175, 0.0
        %1205 = vadd.xlane.f32.xlu0 %v1204
        %v1206 = vpop.xlane.xlu0 %1205
        %v1207 = vsel %vm774, %v1177, 0.0
        %1208 = vadd.xlane.f32.xlu0 %v1207
        %v1209 = vpop.xlane.xlu0 %1208
        %v1218 = vperm.slane %v1188, %v808
        %v1219 = vperm.slane %v1191, %v810
        %v1220 = vsel %vm812, %v1219, %v1218
        %v1221 = vperm.slane %v1194, %v808
        %v1222 = vperm.slane %v1197, %v810
        %v1223 = vsel %vm812, %v1222, %v1221
        %v1224 = vperm.slane %v1200, %v808
        %v1225 = vperm.slane %v1203, %v810
        %v1226 = vsel %vm812, %v1225, %v1224
        %v1227 = vperm.slane %v1206, %v808
        %v1228 = vperm.slane %v1209, %v810
        %v1229 = vsel %vm812, %v1228, %v1227
        %v1230 = vsel %vm823, %v1223, %v1220
        %v1231 = vsel %vm825, %v1226, %v1230
        %v1232 = vsel %vm827, %v1229, %v1231
        %v1234 = vsel %vm830, %v1232, 0.0
        %1235 = vadd.xlane.f32.xlu0 %v1234
        %v1236 = vpop.xlane.xlu0 %1235
        %1245 = vrot.lane.b32.xlu0 %v1138, 126
        %v1246 = vpop.permute.xlu0 %1245
        %1247 = vrot.lane.b32.xlu0 %v1139, 126
        %v1248 = vpop.permute.xlu0 %1247
        %1249 = vrot.lane.b32.xlu0 %v1140, 126
        %v1250 = vpop.permute.xlu0 %1249
        %1251 = vrot.lane.b32.xlu0 %v1141, 126
        %v1252 = vpop.permute.xlu0 %1251
        %1253 = vrot.lane.b32.xlu0 %v1142, 126
        %v1254 = vpop.permute.xlu0 %1253
        %1255 = vrot.lane.b32.xlu0 %v1143, 126
        %v1256 = vpop.permute.xlu0 %1255
        %1257 = vrot.lane.b32.xlu0 %v1144, 126
        %v1258 = vpop.permute.xlu0 %1257
        %1259 = vrot.lane.b32.xlu0 %v1145, 126
        %v1260 = vpop.permute.xlu0 %1259
        %v1269 = vsel %vm774, %v1246, 0.0
        %1270 = vadd.xlane.f32.xlu0 %v1269
        %v1271 = vpop.xlane.xlu0 %1270
        %v1272 = vsel %vm774, %v1248, 0.0
        %1273 = vadd.xlane.f32.xlu0 %v1272
        %v1274 = vpop.xlane.xlu0 %1273
        %v1275 = vsel %vm774, %v1250, 0.0
        %1276 = vadd.xlane.f32.xlu0 %v1275
        %v1277 = vpop.xlane.xlu0 %1276
        %v1278 = vsel %vm774, %v1252, 0.0
        %1279 = vadd.xlane.f32.xlu0 %v1278
        %v1280 = vpop.xlane.xlu0 %1279
        %v1281 = vsel %vm774, %v1254, 0.0
        %1282 = vadd.xlane.f32.xlu0 %v1281
        %v1283 = vpop.xlane.xlu0 %1282
        %v1284 = vsel %vm774, %v1256, 0.0
        %1285 = vadd.xlane.f32.xlu0 %v1284
        %v1286 = vpop.xlane.xlu0 %1285
        %v1287 = vsel %vm774, %v1258, 0.0
        %1288 = vadd.xlane.f32.xlu0 %v1287
        %v1289 = vpop.xlane.xlu0 %1288
        %v1290 = vsel %vm774, %v1260, 0.0
        %1291 = vadd.xlane.f32.xlu0 %v1290
        %v1292 = vpop.xlane.xlu0 %1291
        %v1301 = vperm.slane %v1271, %v808
        %v1302 = vperm.slane %v1274, %v810
        %v1303 = vsel %vm812, %v1302, %v1301
        %v1304 = vperm.slane %v1277, %v808
        %v1305 = vperm.slane %v1280, %v810
        %v1306 = vsel %vm812, %v1305, %v1304
        %v1307 = vperm.slane %v1283, %v808
        %v1308 = vperm.slane %v1286, %v810
        %v1309 = vsel %vm812, %v1308, %v1307
        %v1310 = vperm.slane %v1289, %v808
        %v1311 = vperm.slane %v1292, %v810
        %v1312 = vsel %vm812, %v1311, %v1310
        %v1313 = vsel %vm823, %v1306, %v1303
        %v1314 = vsel %vm825, %v1309, %v1313
        %v1315 = vsel %vm827, %v1312, %v1314
        %v1317 = vsel %vm830, %v1315, 0.0
        %1318 = vadd.xlane.f32.xlu0 %v1317
        %v1319 = vpop.xlane.xlu0 %1318
        %1320 = vst.msk [vmem:[#allocation2 + $0x2] sm:$0xff] %vm301, %v1138
        %1321 = vst.msk [vmem:[#allocation2 + $0xa] sm:$0xff] %vm301, %v1139
        %1322 = vst.msk [vmem:[#allocation2 + $0x1a] sm:$0xff] %vm301, %v1140
        %1323 = vst.msk [vmem:[#allocation2 + $0x22] sm:$0xff] %vm301, %v1141
        %1324 = vst.msk [vmem:[#allocation2 + $0x32] sm:$0xff] %vm301, %v1142
        %1325 = vst.msk [vmem:[#allocation2 + $0x3a] sm:$0xff] %vm301, %v1143
        %1326 = vst.msk [vmem:[#allocation2 + $0x4a] sm:$0xff] %vm301, %v1144
        %1327 = vst.msk [vmem:[#allocation2 + $0x52] sm:$0xff] %vm301, %v1145
        %v1328 = vld [vmem:[#allocation2 + $0x2] sm:$0xff]
        %v1329 = vld [vmem:[#allocation2 + $0xa] sm:$0xff]
        %v1330 = vld [vmem:[#allocation2 + $0x1a] sm:$0xff]
        %v1331 = vld [vmem:[#allocation2 + $0x22] sm:$0xff]
        %v1332 = vld [vmem:[#allocation2 + $0x32] sm:$0xff]
        %v1333 = vld [vmem:[#allocation2 + $0x3a] sm:$0xff]
        %v1334 = vld [vmem:[#allocation2 + $0x4a] sm:$0xff]
        %v1335 = vld [vmem:[#allocation2 + $0x52] sm:$0xff]
        %1344 = vrot.lane.b32.xlu0 %v1328, 127
        %v1345 = vpop.permute.xlu0 %1344
        %1346 = vrot.lane.b32.xlu0 %v1329, 127
        %v1347 = vpop.permute.xlu0 %1346
        %1348 = vrot.lane.b32.xlu0 %v1330, 127
        %v1349 = vpop.permute.xlu0 %1348
        %1350 = vrot.lane.b32.xlu0 %v1331, 127
        %v1351 = vpop.permute.xlu0 %1350
        %1352 = vrot.lane.b32.xlu0 %v1332, 127
        %v1353 = vpop.permute.xlu0 %1352
        %1354 = vrot.lane.b32.xlu0 %v1333, 127
        %v1355 = vpop.permute.xlu0 %1354
        %1356 = vrot.lane.b32.xlu0 %v1334, 127
        %v1357 = vpop.permute.xlu0 %1356
        %1358 = vrot.lane.b32.xlu0 %v1335, 127
        %v1359 = vpop.permute.xlu0 %1358
        %v1368 = vmax.f32 %v1328, %v1345
        %v1369 = vmax.f32 %v1329, %v1347
        %v1370 = vmax.f32 %v1330, %v1349
        %v1371 = vmax.f32 %v1331, %v1351
        %v1372 = vmax.f32 %v1332, %v1353
        %v1373 = vmax.f32 %v1333, %v1355
        %v1374 = vmax.f32 %v1334, %v1357
        %v1375 = vmax.f32 %v1335, %v1359
        %1376 = vrot.lane.b32.xlu0 %v1328, 126
        %v1377 = vpop.permute.xlu0 %1376
        %1378 = vrot.lane.b32.xlu0 %v1329, 126
        %v1379 = vpop.permute.xlu0 %1378
        %1380 = vrot.lane.b32.xlu0 %v1330, 126
        %v1381 = vpop.permute.xlu0 %1380
        %1382 = vrot.lane.b32.xlu0 %v1331, 126
        %v1383 = vpop.permute.xlu0 %1382
        %1384 = vrot.lane.b32.xlu0 %v1332, 126
        %v1385 = vpop.permute.xlu0 %1384
        %1386 = vrot.lane.b32.xlu0 %v1333, 126
        %v1387 = vpop.permute.xlu0 %1386
        %1388 = vrot.lane.b32.xlu0 %v1334, 126
        %v1389 = vpop.permute.xlu0 %1388
        %1390 = vrot.lane.b32.xlu0 %v1335, 126
        %v1391 = vpop.permute.xlu0 %1390
        %v1400 = vmax.f32 %v1368, %v1377
        %v1401 = vmax.f32 %v1369, %v1379
        %v1402 = vmax.f32 %v1370, %v1381
        %v1403 = vmax.f32 %v1371, %v1383
        %v1404 = vmax.f32 %v1372, %v1385
        %v1405 = vmax.f32 %v1373, %v1387
        %v1406 = vmax.f32 %v1374, %v1389
        %v1407 = vmax.f32 %v1375, %v1391
        %1408 = vrot.lane.b32.xlu0 %v1328, 125
        %v1409 = vpop.permute.xlu0 %1408
        %1410 = vrot.lane.b32.xlu0 %v1329, 125
        %v1411 = vpop.permute.xlu0 %1410
        %1412 = vrot.lane.b32.xlu0 %v1330, 125
        %v1413 = vpop.permute.xlu0 %1412
        %1414 = vrot.lane.b32.xlu0 %v1331, 125
        %v1415 = vpop.permute.xlu0 %1414
        %1416 = vrot.lane.b32.xlu0 %v1332, 125
        %v1417 = vpop.permute.xlu0 %1416
        %1418 = vrot.lane.b32.xlu0 %v1333, 125
        %v1419 = vpop.permute.xlu0 %1418
        %1420 = vrot.lane.b32.xlu0 %v1334, 125
        %v1421 = vpop.permute.xlu0 %1420
        %1422 = vrot.lane.b32.xlu0 %v1335, 125
        %v1423 = vpop.permute.xlu0 %1422
        %v1432 = vmax.f32 %v1400, %v1409
        %v1433 = vmax.f32 %v1401, %v1411
        %v1434 = vmax.f32 %v1402, %v1413
        %v1435 = vmax.f32 %v1403, %v1415
        %v1436 = vmax.f32 %v1404, %v1417
        %v1437 = vmax.f32 %v1405, %v1419
        %v1438 = vmax.f32 %v1406, %v1421
        %v1439 = vmax.f32 %v1407, %v1423
        %1440 = vrot.lane.b32.xlu0 %v1328, 124
        %v1441 = vpop.permute.xlu0 %1440
        %1442 = vrot.lane.b32.xlu0 %v1329, 124
        %v1443 = vpop.permute.xlu0 %1442
        %1444 = vrot.lane.b32.xlu0 %v1330, 124
        %v1445 = vpop.permute.xlu0 %1444
        %1446 = vrot.lane.b32.xlu0 %v1331, 124
        %v1447 = vpop.permute.xlu0 %1446
        %1448 = vrot.lane.b32.xlu0 %v1332, 124
        %v1449 = vpop.permute.xlu0 %1448
        %1450 = vrot.lane.b32.xlu0 %v1333, 124
        %v1451 = vpop.permute.xlu0 %1450
        %1452 = vrot.lane.b32.xlu0 %v1334, 124
        %v1453 = vpop.permute.xlu0 %1452
        %1454 = vrot.lane.b32.xlu0 %v1335, 124
        %v1455 = vpop.permute.xlu0 %1454
        %v1464 = vmax.f32 %v1432, %v1441
        %v1465 = vmax.f32 %v1433, %v1443
        %v1466 = vmax.f32 %v1434, %v1445
        %v1467 = vmax.f32 %v1435, %v1447
        %v1468 = vmax.f32 %v1436, %v1449
        %v1469 = vmax.f32 %v1437, %v1451
        %v1470 = vmax.f32 %v1438, %v1453
        %v1471 = vmax.f32 %v1439, %v1455
        %1480 = vrot.lane.b32.xlu0 %v1464, 2
        %v1481 = vpop.permute.xlu0 %1480
        %1482 = vrot.lane.b32.xlu0 %v1465, 2
        %v1483 = vpop.permute.xlu0 %1482
        %1484 = vrot.lane.b32.xlu0 %v1466, 2
        %v1485 = vpop.permute.xlu0 %1484
        %1486 = vrot.lane.b32.xlu0 %v1467, 2
        %v1487 = vpop.permute.xlu0 %1486
        %1488 = vrot.lane.b32.xlu0 %v1468, 2
        %v1489 = vpop.permute.xlu0 %1488
        %1490 = vrot.lane.b32.xlu0 %v1469, 2
        %v1491 = vpop.permute.xlu0 %1490
        %1492 = vrot.lane.b32.xlu0 %v1470, 2
        %v1493 = vpop.permute.xlu0 %1492
        %1494 = vrot.lane.b32.xlu0 %v1471, 2
        %v1495 = vpop.permute.xlu0 %1494
        %1504 = vst.msk [vmem:[#allocation2 + $0x2] sm:$0xff] %vm301, %v1481
        %1505 = vst.msk [vmem:[#allocation2 + $0xa] sm:$0xff] %vm301, %v1483
        %1506 = vst.msk [vmem:[#allocation2 + $0x1a] sm:$0xff] %vm301, %v1485
        %1507 = vst.msk [vmem:[#allocation2 + $0x22] sm:$0xff] %vm301, %v1487
        %1508 = vst.msk [vmem:[#allocation2 + $0x32] sm:$0xff] %vm301, %v1489
        %1509 = vst.msk [vmem:[#allocation2 + $0x3a] sm:$0xff] %vm301, %v1491
        %1510 = vst.msk [vmem:[#allocation2 + $0x4a] sm:$0xff] %vm301, %v1493
        %1511 = vst.msk [vmem:[#allocation2 + $0x52] sm:$0xff] %vm301, %v1495
        %v1512 = vld [vmem:[#allocation2] sm:$0xff]
        %v1513 = vld [vmem:[#allocation2 + $0x8] sm:$0xff]
        %v1514 = vld [vmem:[#allocation2 + $0x18] sm:$0xff]
        %v1515 = vld [vmem:[#allocation2 + $0x20] sm:$0xff]
        %v1516 = vld [vmem:[#allocation2 + $0x30] sm:$0xff]
        %v1517 = vld [vmem:[#allocation2 + $0x38] sm:$0xff]
        %v1518 = vld [vmem:[#allocation2 + $0x48] sm:$0xff]
        %v1519 = vld [vmem:[#allocation2 + $0x50] sm:$0xff]
        %v1520 = vld [vmem:[#allocation2 + $0x1] sm:$0xff]
        %v1521 = vld [vmem:[#allocation2 + $0x9] sm:$0xff]
        %v1522 = vld [vmem:[#allocation2 + $0x19] sm:$0xff]
        %v1523 = vld [vmem:[#allocation2 + $0x21] sm:$0xff]
        %v1524 = vld [vmem:[#allocation2 + $0x31] sm:$0xff]
        %v1525 = vld [vmem:[#allocation2 + $0x39] sm:$0xff]
        %v1526 = vld [vmem:[#allocation2 + $0x49] sm:$0xff]
        %v1527 = vld [vmem:[#allocation2 + $0x51] sm:$0xff]
        %v1528 = vmax.f32 %v1512, %v1520
        %v1529 = vmax.f32 %v1513, %v1521
        %v1530 = vmax.f32 %v1514, %v1522
        %v1531 = vmax.f32 %v1515, %v1523
        %v1532 = vmax.f32 %v1516, %v1524
        %v1533 = vmax.f32 %v1517, %v1525
        %v1534 = vmax.f32 %v1518, %v1526
        %v1535 = vmax.f32 %v1519, %v1527
        %v1536 = vld [vmem:[#allocation2 + $0x2] sm:$0xff]
        %v1537 = vld [vmem:[#allocation2 + $0xa] sm:$0xff]
        %v1538 = vld [vmem:[#allocation2 + $0x1a] sm:$0xff]
        %v1539 = vld [vmem:[#allocation2 + $0x22] sm:$0xff]
        %v1540 = vld [vmem:[#allocation2 + $0x32] sm:$0xff]
        %v1541 = vld [vmem:[#allocation2 + $0x3a] sm:$0xff]
        %v1542 = vld [vmem:[#allocation2 + $0x4a] sm:$0xff]
        %v1543 = vld [vmem:[#allocation2 + $0x52] sm:$0xff]
        %v1544 = vmax.f32 %v1528, %v1536
        %v1545 = vmax.f32 %v1529, %v1537
        %v1546 = vmax.f32 %v1530, %v1538
        %v1547 = vmax.f32 %v1531, %v1539
        %v1548 = vmax.f32 %v1532, %v1540
        %v1549 = vmax.f32 %v1533, %v1541
        %v1550 = vmax.f32 %v1534, %v1542
        %v1551 = vmax.f32 %v1535, %v1543
        %v1552 = vld [vmem:[#allocation2 + $0x3] sm:$0xff]
        %v1553 = vld [vmem:[#allocation2 + $0xb] sm:$0xff]
        %v1554 = vld [vmem:[#allocation2 + $0x1b] sm:$0xff]
        %v1555 = vld [vmem:[#allocation2 + $0x23] sm:$0xff]
        %v1556 = vld [vmem:[#allocation2 + $0x33] sm:$0xff]
        %v1557 = vld [vmem:[#allocation2 + $0x3b] sm:$0xff]
        %v1558 = vld [vmem:[#allocation2 + $0x4b] sm:$0xff]
        %v1559 = vld [vmem:[#allocation2 + $0x53] sm:$0xff]
        %v1560 = vmax.f32 %v1544, %v1552
        %v1561 = vmax.f32 %v1545, %v1553
        %v1562 = vmax.f32 %v1546, %v1554
        %v1563 = vmax.f32 %v1547, %v1555
        %v1564 = vmax.f32 %v1548, %v1556
        %v1565 = vmax.f32 %v1549, %v1557
        %v1566 = vmax.f32 %v1550, %v1558
        %v1567 = vmax.f32 %v1551, %v1559
        %v1568 = vld [vmem:[#allocation2 + $0x4] sm:$0xff]
        %v1569 = vld [vmem:[#allocation2 + $0xc] sm:$0xff]
        %v1570 = vld [vmem:[#allocation2 + $0x1c] sm:$0xff]
        %v1571 = vld [vmem:[#allocation2 + $0x24] sm:$0xff]
        %v1572 = vld [vmem:[#allocation2 + $0x34] sm:$0xff]
        %v1573 = vld [vmem:[#allocation2 + $0x3c] sm:$0xff]
        %v1574 = vld [vmem:[#allocation2 + $0x4c] sm:$0xff]
        %v1575 = vld [vmem:[#allocation2 + $0x54] sm:$0xff]
        %v1576 = vmax.f32 %v1560, %v1568
        %v1577 = vmax.f32 %v1561, %v1569
        %v1578 = vmax.f32 %v1562, %v1570
        %v1579 = vmax.f32 %v1563, %v1571
        %v1580 = vmax.f32 %v1564, %v1572
        %v1581 = vmax.f32 %v1565, %v1573
        %v1582 = vmax.f32 %v1566, %v1574
        %v1583 = vmax.f32 %v1567, %v1575
        %v1584 = vmul.f32 %v1576, %v470
        %v1585 = vmul.f32 %v1577, %v471
        %v1586 = vmul.f32 %v1578, %v472
        %v1587 = vmul.f32 %v1579, %v473
        %v1588 = vmul.f32 %v1580, %v474
        %v1589 = vmul.f32 %v1581, %v475
        %v1590 = vmul.f32 %v1582, %v476
        %v1591 = vmul.f32 %v1583, %v477
        %1600 = vrot.lane.b32.xlu0 %v1584, 126
        %v1601 = vpop.permute.xlu0 %1600
        %1602 = vrot.lane.b32.xlu0 %v1585, 126
        %v1603 = vpop.permute.xlu0 %1602
        %1604 = vrot.lane.b32.xlu0 %v1586, 126
        %v1605 = vpop.permute.xlu0 %1604
        %1606 = vrot.lane.b32.xlu0 %v1587, 126
        %v1607 = vpop.permute.xlu0 %1606
        %1608 = vrot.lane.b32.xlu0 %v1588, 126
        %v1609 = vpop.permute.xlu0 %1608
        %1610 = vrot.lane.b32.xlu0 %v1589, 126
        %v1611 = vpop.permute.xlu0 %1610
        %1612 = vrot.lane.b32.xlu0 %v1590, 126
        %v1613 = vpop.permute.xlu0 %1612
        %1614 = vrot.lane.b32.xlu0 %v1591, 126
        %v1615 = vpop.permute.xlu0 %1614
        %v1624 = vsel %vm774, %v1601, 0.0
        %1625 = vadd.xlane.f32.xlu0 %v1624
        %v1626 = vpop.xlane.xlu0 %1625
        %v1627 = vsel %vm774, %v1603, 0.0
        %1628 = vadd.xlane.f32.xlu0 %v1627
        %v1629 = vpop.xlane.xlu0 %1628
        %v1630 = vsel %vm774, %v1605, 0.0
        %1631 = vadd.xlane.f32.xlu0 %v1630
        %v1632 = vpop.xlane.xlu0 %1631
        %v1633 = vsel %vm774, %v1607, 0.0
        %1634 = vadd.xlane.f32.xlu0 %v1633
        %v1635 = vpop.xlane.xlu0 %1634
        %v1636 = vsel %vm774, %v1609, 0.0
        %1637 = vadd.xlane.f32.xlu0 %v1636
        %v1638 = vpop.xlane.xlu0 %1637
        %v1639 = vsel %vm774, %v1611, 0.0
        %1640 = vadd.xlane.f32.xlu0 %v1639
        %v1641 = vpop.xlane.xlu0 %1640
        %v1642 = vsel %vm774, %v1613, 0.0
        %1643 = vadd.xlane.f32.xlu0 %v1642
        %v1644 = vpop.xlane.xlu0 %1643
        %v1645 = vsel %vm774, %v1615, 0.0
        %1646 = vadd.xlane.f32.xlu0 %v1645
        %v1647 = vpop.xlane.xlu0 %1646
        %v1656 = vperm.slane %v1626, %v808
        %v1657 = vperm.slane %v1629, %v810
        %v1658 = vsel %vm812, %v1657, %v1656
        %v1659 = vperm.slane %v1632, %v808
        %v1660 = vperm.slane %v1635, %v810
        %v1661 = vsel %vm812, %v1660, %v1659
        %v1662 = vperm.slane %v1638, %v808
        %v1663 = vperm.slane %v1641, %v810
        %v1664 = vsel %vm812, %v1663, %v1662
        %v1665 = vperm.slane %v1644, %v808
        %v1666 = vperm.slane %v1647, %v810
        %v1667 = vsel %vm812, %v1666, %v1665
        %v1668 = vsel %vm823, %v1661, %v1658
        %v1669 = vsel %vm825, %v1664, %v1668
        %v1670 = vsel %vm827, %v1667, %v1669
        %v1672 = vsel %vm830, %v1670, 0.0
        %1673 = vadd.xlane.f32.xlu0 %v1672
        %v1674 = vpop.xlane.xlu0 %1673
        %v1675 = vadd.f32 %v1319, 1e-07
        %v1676 = vrcp.pop %v1675
        %v1677 = vmul.f32 %v1675, %v1676
        %v1678 = vsub.f32 1.0, %v1677
        %v1679 = vmul.f32 %v1676, %v1678
        %v1680 = vadd.f32 %v1676, %v1679
        %vm1681 = vweird.f32 %v1675
        %vm1682 = vweird.f32 %v1676
        %vm1683 = vmor %vm1681, %vm1682
        %v1684 = vsel %vm1683, %v1676, %v1680
        %v1685 = vand.u32 2147483647, %v1675
        %vm1686 = vcmp.eq.f32.partialorder %v1685, 8.507059e+37
        %v1687 = vand.u32 %v1675, 2147483648
        %v1688 = vor.u32 1.1754944e-38, %v1687
        %v1689 = vsel %vm1686, %v1688, %v1684
        %v1690 = vmul.f32 %v1236, %v1689
        %v1691 = vadd.f32 %v833, 1e-07
        %v1692 = vrcp.pop %v1691
        %v1693 = vmul.f32 %v1691, %v1692
        %v1694 = vsub.f32 1.0, %v1693
        %v1695 = vmul.f32 %v1692, %v1694
        %v1696 = vadd.f32 %v1692, %v1695
        %vm1697 = vweird.f32 %v1691
        %vm1698 = vweird.f32 %v1692
        %vm1699 = vmor %vm1697, %vm1698
        %v1700 = vsel %vm1699, %v1692, %v1696
        %v1701 = vand.u32 2147483647, %v1691
        %vm1702 = vcmp.eq.f32.partialorder %v1701, 8.507059e+37
        %v1703 = vand.u32 %v1691, 2147483648
        %v1704 = vor.u32 1.1754944e-38, %v1703
        %v1705 = vsel %vm1702, %v1704, %v1700
        %v1706 = vmul.f32 %v1674, %v1705
        %v1707 = vmul.f32 %v1690, 2.0
        %v1708 = vmul.f32 %v1707, %v1706
        %v1709 = vadd.f32 %v1690, %v1706
        %v1710 = vadd.f32 %v1709, 1e-07
        %v1711 = vrcp.pop %v1710
        %v1712 = vmul.f32 %v1710, %v1711
        %v1713 = vsub.f32 1.0, %v1712
        %v1714 = vmul.f32 %v1711, %v1713
        %v1715 = vadd.f32 %v1711, %v1714
        %vm1716 = vweird.f32 %v1710
        %vm1717 = vweird.f32 %v1711
        %vm1718 = vmor %vm1716, %vm1717
        %v1719 = vsel %vm1718, %v1711, %v1715
        %v1720 = vand.u32 2147483647, %v1710
        %vm1721 = vcmp.eq.f32.partialorder %v1720, 8.507059e+37
        %v1722 = vand.u32 %v1710, 2147483648
        %v1723 = vor.u32 1.1754944e-38, %v1722
        %v1724 = vsel %vm1721, %v1723, %v1719
        %v1725 = vmul.f32 %v1708, %v1724
        %v1726 = vsub.f32 1.0, %v1725
        %vm1727 = vcmask 3072
        %1728 = vst.msk [vmem:[%s205] sm:$0xf] %vm1727, %v1726
        %p1729 = scmp.lt.s32.totalorder %s19, 1
        %s1730 = scalar_select %p1729, %s19, 1
        %s1731 = smul.addr %s1730, 4
        %s1732 = scalar_lea.vmem %s2, %s1731
        // Predicated region
        $region37: #{tpu_custom_call.1} parent=27 // pred_check
          %p1733 = pneg %p89
        $region38: #{tpu_custom_call.1} parent=27 // pred_check_branch
          %1735 = sbr.rel (%p1733) target = $region40
        $region39: #{tpu_custom_call.1} parent=27 // pred_region
          _
        $region40: #{tpu_custom_call.1} parent=27 // pred_fallthru
          _
      $region28: #{tpu_custom_call.1} parent=5 // pred_fallthru
        _
      %p1736 = scmp.le.s32.totalorder 2, %s14
      // Predicated region
      $region41: #{tpu_custom_call.1} parent=5 // pred_check
        %p1737 = pneg %p1736
      $region42: #{tpu_custom_call.1} parent=5 // pred_check_branch
        %1739 = sbr.rel (%p1737) target = $region44
      $region43: #{tpu_custom_call.1} parent=5 // pred_region
        %s1740 = ssub.s32 %s14, 2
        // Predicated region
        $region45: #{tpu_custom_call.1} parent=43 // pred_check
          %p1741 = pneg %p95
        $region46: #{tpu_custom_call.1} parent=43 // pred_check_branch
          %1743 = sbr.rel (%p1741) target = $region48
        $region47: #{tpu_custom_call.1} parent=43 // pred_region
          %p1744 = scmp.lt.s32.totalorder %s20, 1
          %s1745 = scalar_select %p1744, %s20, 1
          %s1746 = smul.addr %s1745, 4
          %s1747 = scalar_lea.vmem %s2, %s1746
        $region48: #{tpu_custom_call.1} parent=43 // pred_fallthru
          _
      $region44: #{tpu_custom_call.1} parent=5 // pred_fallthru
        _
    $region6: #{tpu_custom_call.1} parent=1 // loop_footer
      %s18 = sadd.s32 1, %s14
    $region7: #{tpu_custom_call.1} parent=1 // loop_footer_branch
      %13 = sbr.rel target = $region3
    $region8: #{tpu_custom_call.1} parent=1 // loop_exit
      _
    %1748 = vsyncpa [#allocation4], 1
    %s1749 = scalar_lea.sflag [#allocation4], 1
    %1750 = vsyncpa %s1749, 1
    %1751 = vsyncpa [#allocation6], 1
    %s1752 = scalar_lea.sflag [#allocation6], 1
    %1753 = vsyncpa %s1752, 1

</llo_original>
